<compile_context>
chip_gen: v7x
topology: tpu7x:2x2x1
jax: 0.10.0
libtpu: 0.0.40
codegen_flags: <defaults>
</compile_context>

<pallas_src>
import jax
import jax.numpy as jnp
from jax.experimental import pallas as pl
from jax.experimental.pallas import tpu as pltpu


# ----------------------------- Pallas kernel ---------------------------------
def _encoder_kernel(x_tok_ref, pos_ref,
                    ln1g_ref, ln1b_ref,
                    wq_ref, wk_ref, wv_ref, wc_ref,
                    w1_ref, b1_ref, w2_ref, b2_ref,
                    ln2g_ref, ln2b_ref,
                    out_ref,
                    xnorm_sc, resid_sc, ffw_sc):
    """Grid point (b, l, f): batch chunk b, encoder layer l, FFN F-tile f.

    x_tok_ref : (bs, D)        scaled token embeddings for this batch chunk (f32)
    pos_ref   : (1, S, D)      this layer's scaled positional embedding (f32, not tiled)
    wq/wk/wv  : (1, H, D, dd)  head-major projection weights (1/sqrt(dd) folded into wq)
    wc        : (1, H, dd, D)  head-major output projection
    w1/b1     : (1, D, TF) / (1, 1, TF)   current FFN column tile
    w2        : (1, TF, D)                current FFN row tile
    out_ref   : (bs, D)        carried residual stream (VMEM-resident across l, f)
    """
    l = pl.program_id(1)
    f = pl.program_id(2)
    nf = pl.num_programs(2)

    _, n_heads, d_model, dd = wq_ref.shape
    seq = pos_ref.shape[1]
    bs_tile = out_ref.shape[0]
    bb = bs_tile // seq                    # batch elements in this chunk
    cdt = wq_ref.dtype                     # MXU operand dtype (bf16 by default)
    f32 = jnp.float32
    exact_recip = cdt == jnp.float32       # exact softmax divide in parity mode

    def layernorm(x, g_ref, b_ref):        # f32 statistics, eps = 1e-6 (matches torch)
        mu = jnp.mean(x, axis=-1, keepdims=True)
        xc = x - mu
        var = jnp.mean(xc * xc, axis=-1, keepdims=True)
        return xc * jax.lax.rsqrt(var + 1e-6) * g_ref[0] + b_ref[0]

    # -- layer 0: seed the carried residual stream with the token embeddings.
    #    (Output blocks are never preloaded from HBM, so this copy is still required
    #     even though x_tok is HBM-aliased to the output; the alias only removes the
    #     extra HBM buffer / copy outside the kernel.)
    @pl.when((l == 0) & (f == 0))
    def _seed():
        out_ref[...] = x_tok_ref[...]

    # -- once per layer (first FFN tile): embeddings, lnorm_1, full self-attention.
    @pl.when(f == 0)
    def _attention():
        x_prev = out_ref[...]                                        # (bs, D) f32
        # Per-layer positional embedding broadcast over batch in-kernel (pos is (S, D)).
        # NOTE: S a multiple of 8 keeps these leading-dim reshapes relayout-free.
        x_embed = (x_prev.reshape(bb, seq, d_model) + pos_ref[0]).reshape(bs_tile, d_model)
        x_norm = layernorm(x_embed, ln1g_ref, ln1b_ref)              # f32
        x_norm_c = x_norm.astype(cdt)
        xnorm_sc[...] = x_norm_c                                     # reused by every FFN tile

        # Multi-head self-attention, mask=None (zero mask).  Heads indexed on the leading
        # dim of the head-major weights: no lane slicing, no concatenate; each head's
        # context is folded through its wc row-block into a single f32 accumulator.
        acc = x_embed                                                # x_embed + attention
        for h in range(n_heads):                                     # static unroll
            q = jnp.dot(x_norm_c, wq_ref[0, h], preferred_element_type=f32)   # (bs, dd)
            k = jnp.dot(x_norm_c, wk_ref[0, h], preferred_element_type=f32)
            v = jnp.dot(x_norm_c, wv_ref[0, h], preferred_element_type=f32)
            qh = q.reshape(bb, seq, dd).astype(cdt)
            kh = k.reshape(bb, seq, dd).astype(cdt)
            vh = v.reshape(bb, seq, dd).astype(cdt)
            # Single-leading-batch-dim einsums (contract last dims, no explicit k.T).
            logits = jnp.einsum('bqd,bkd->bqk', qh, kh,
                                preferred_element_type=f32)          # (bb, S, S) f32
            m = jnp.max(logits, axis=-1, keepdims=True)
            e = jnp.exp(logits - m)
            denom = jnp.sum(e, axis=-1, keepdims=True)
            p = (e * pl.reciprocal(denom, approx=not exact_recip)).astype(cdt)
            ctx = jnp.einsum('bqk,bkd->bqd', p, vh,
                             preferred_element_type=f32)             # (bb, S, dd)
            acc = acc + jnp.dot(ctx.reshape(bs_tile, dd).astype(cdt), wc_ref[0, h],
                                preferred_element_type=f32)
        resid_sc[...] = acc
        # Start the FFN accumulator with the ffwd_2 bias (added exactly once).
        ffw_sc[...] = jnp.broadcast_to(b2_ref[0], ffw_sc.shape)

    # -- every grid step: one F tile of the FFN (w1 / w2 streamed over the f axis).
    h1 = jnp.dot(xnorm_sc[...], w1_ref[0], preferred_element_type=f32) + b1_ref[0]
    h1 = jnp.maximum(h1, 0.0).astype(cdt)                            # ReLU in f32
    ffw_sc[...] += jnp.dot(h1, w2_ref[0], preferred_element_type=f32)

    # -- last F tile: lnorm_2 over the full FFN output, add residual, emit layer output.
    @pl.when(f == nf - 1)
    def _finish():
        ffw_out = layernorm(ffw_sc[...], ln2g_ref, ln2b_ref)
        out_ref[...] = resid_sc[...] + ffw_out


# ----------------------------- helpers ----------------------------------------
def _pick_batch_block(B, S):
    # Aim for 2 batch chunks so the "parallel" axis can be split across v7x's 2 TCs
    # while keeping chunks large (weights are re-fetched once per chunk).
    if B % 2 == 0 and ((B // 2) * S) % 8 == 0:
        return B // 2
    return B


def _pick_ffwd_tile(F, target=1024):
    # Stream the FFN weights in F-tiles of ~`target` columns (bounded VMEM on v7x).
    if F <= target or F % 128 != 0:
        return F
    tf = target
    while F % tf != 0:
        tf -= 128
    return tf


def _vmem_limit_bytes():
    # The default scoped-VMEM limit (16 MiB v5e / 32 MiB v6e, v7x) throttles the fused
    # whole-layer blocks at production sizes; raise it explicitly with headroom.
    try:
        cap = int(pltpu.get_tpu_info().vmem_capacity_bytes)
    except Exception:
        cap = 64 * 1024 * 1024            # conservative (v7x per-core VMEM)
    return int(min(100 * 1024 * 1024, cap * 7 // 8))


def pack_params(params, *, n_heads, mxu_dtype=jnp.bfloat16):
    """Pack parameters into the kernel layout.

    * Attention weights -> head-major (L, H, D, dd) / (L, H, dd, D), 1/sqrt(dd) baked
      into wq.
    * Large matmul weights cast to `mxu_dtype` (bf16 by default; use jnp.float32 for
      bit-closer parity with the f32 PyTorch reference).
    * LayerNorm params, biases, embeddings stay f32 (all VPU elementwise work is f32).
    """
    L, D, _ = params["wq"].shape
    dd = D // n_heads
    scale = 1.0 / float(dd) ** 0.5

    def split_in(w, pre_scale=1.0):        # (L, D, D) -> (L, H, D, dd)
        return (w * pre_scale).reshape(L, D, n_heads, dd).transpose(0, 2, 1, 3).astype(mxu_dtype)

    packed = dict(params)
    packed["wq"] = split_in(params["wq"], scale)
    packed["wk"] = split_in(params["wk"])
    packed["wv"] = split_in(params["wv"])
    packed["wc"] = params["wc"].reshape(L, n_heads, dd, D).astype(mxu_dtype)
    packed["w1"] = params["w1"].astype(mxu_dtype)
    packed["w2"] = params["w2"].astype(mxu_dtype)
    return packed


# ----------------------------- encoder forward --------------------------------
@jax.jit
def encoder_forward(x_tokens, packed):
    """x_tokens: (B, S) int32 token ids; packed: output of pack_params.
    Returns (B, S, d_model) float32 (eval-mode forward)."""
    B, S = x_tokens.shape
    enc_embed = packed["enc_embed"]
    D = enc_embed.shape[1]
    L, H, _, dd = packed["wq"].shape
    F = packed["w1"].shape[2]
    BS = B * S
    d_rsqrt = jax.lax.rsqrt(jnp.float32(D))

    # Glue: embedding gather + rsqrt(d_model) scaling (eval-mode dropout = identity).
    x_tok = jnp.take(enc_embed, x_tokens.reshape(-1), axis=0) * d_rsqrt    # (B*S, D) f32
    # Per-layer positional embedding, scaled, NOT tiled over batch (broadcast in-kernel).
    pos = packed["pos_embed"][:, :S, :] * d_rsqrt                          # (L, S, D) f32

    bb = _pick_batch_block(B, S)
    bs_tile = bb * S
    GB = B // bb
    TF = _pick_ffwd_tile(F)
    KF = F // TF
    wdt = packed["wq"].dtype

    def l_only(shape):
        nd = len(shape)
        return pl.BlockSpec((1,) + shape, lambda b, l, f: (l,) + (0,) * nd)

    in_specs = [
        pl.BlockSpec((bs_tile, D), lambda b, l, f: (b, 0)),      # x_tok (per batch chunk)
        pl.BlockSpec((1, S, D), lambda b, l, f: (l, 0, 0)),      # pos (per layer)
        l_only((1, D)), l_only((1, D)),                          # ln1 gamma / beta
        l_only((H, D, dd)), l_only((H, D, dd)), l_only((H, D, dd)),   # wq, wk, wv
        l_only((H, dd, D)),                                      # wc
        pl.BlockSpec((1, D, TF), lambda b, l, f: (l, 0, f)),     # w1  (F-streamed)
        pl.BlockSpec((1, 1, TF), lambda b, l, f: (l, 0, f)),     # b1  (F-streamed)
        pl.BlockSpec((1, TF, D), lambda b, l, f: (l, f, 0)),     # w2  (F-streamed)
        l_only((1, D)),                                          # b2
        l_only((1, D)), l_only((1, D)),                          # ln2 gamma / beta
    ]
    out_spec = pl.BlockSpec((bs_tile, D), lambda b, l, f: (b, 0))  # VMEM carry over (l, f)

    out = pl.pallas_call(
        _encoder_kernel,
        out_shape=jax.ShapeDtypeStruct((BS, D), jnp.float32),
        grid=(GB, L, KF),
        in_specs=in_specs,
        out_specs=out_spec,
        scratch_shapes=[
            pltpu.VMEM((bs_tile, D), wdt),            # x_norm (MXU operand dtype)
            pltpu.VMEM((bs_tile, D), jnp.float32),    # x_embed + attention output
            pltpu.VMEM((bs_tile, D), jnp.float32),    # FFN accumulator
        ],
        input_output_aliases={0: 0},                  # token-emb slab shares the out buffer
        compiler_params=pltpu.CompilerParams(
            dimension_semantics=("parallel", "arbitrary", "arbitrary"),
            vmem_limit_bytes=_vmem_limit_bytes(),
        ),
    )(x_tok, pos,
      packed["ln1_g"], packed["ln1_b"],
      packed["wq"], packed["wk"], packed["wv"], packed["wc"],
      packed["w1"], packed["b1"], packed["w2"], packed["b2"],
      packed["ln2_g"], packed["ln2_b"])
    return out.reshape(B, S, D)


# ----------------------------- parameter init --------------------------------
def init_params(key, n_layers, d_model, d_ffwd, vocab_size, max_seq_len):
    """Parameters in natural f32 layout (Linear weights stored (in, out): y = x @ W + b)."""
    k_emb, k_pos, kq, kk, kv, kc, k1, k2 = jax.random.split(key, 8)
    p = {}
    p["enc_embed"] = jax.random.normal(k_emb, (vocab_size, d_model), jnp.float32) * 0.02
    p["pos_embed"] = jax.random.normal(
        k_pos, (n_layers, max_seq_len, d_model), jnp.float32) * 0.02
    p["wq"] = jax.random.normal(kq, (n_layers, d_model, d_model), jnp.float32) * 0.05
    p["wk"] = jax.random.normal(kk, (n_layers, d_model, d_model), jnp.float32) * 0.05
    p["wv"] = jax.random.normal(kv, (n_layers, d_model, d_model), jnp.float32) * 0.05
    p["wc"] = jax.random.normal(kc, (n_layers, d_model, d_model), jnp.float32) * 0.05
    p["w1"] = jax.random.normal(k1, (n_layers, d_model, d_ffwd), jnp.float32) * 0.05
    p["b1"] = jnp.zeros((n_layers, 1, d_ffwd), jnp.float32)
    p["w2"] = jax.random.normal(k2, (n_layers, d_ffwd, d_model), jnp.float32) * 0.05
    p["b2"] = jnp.zeros((n_layers, 1, d_model), jnp.float32)
    p["ln1_g"] = jnp.ones((n_layers, 1, d_model), jnp.float32)
    p["ln1_b"] = jnp.zeros((n_layers, 1, d_model), jnp.float32)
    p["ln2_g"] = jnp.ones((n_layers, 1, d_model), jnp.float32)
    p["ln2_b"] = jnp.zeros((n_layers, 1, d_model), jnp.float32)
    return p


# ---------------------------------- main --------------------------------------
if __name__ == "__main__":
    # NOTE: demo shapes are tiny (D=32 < 128 lanes) and exist only to exercise the
    # kernel end-to-end; the layout/tiling decisions target production D/F/S.
    n_layers = 2
    d_model = 32
    n_heads = 4
    d_ffwd = 64
    vocab_size = 50
    max_seq_length = 16

    batch = 2
    seq = 8

    key = jax.random.PRNGKey(0)
    key, k_tok = jax.random.split(key)
    params = init_params(key, n_layers, d_model, d_ffwd, vocab_size, max_seq_length)
    packed = pack_params(params, n_heads=n_heads)      # bf16 MXU weights, head-major attn
    x_tokens = jax.random.randint(k_tok, (batch, seq), 0, vocab_size, dtype=jnp.int32)

    out = encoder_forward(x_tokens, packed)
    out = jax.block_until_ready(out)
    assert out.shape == (batch, seq, d_model)
    assert bool(jnp.all(jnp.isfinite(out)))
    print("KERNEL_OK")
</pallas_src>

<mosaic_0001>
module attributes {stable_mosaic.version = 11 : i64} {
  func.func @_encoder_kernel(%arg0: i32, %arg1: i32, %arg2: i32, %arg3: memref<8x32xf32, #tpu.memory_space<vmem>>, %arg4: memref<1x8x32xf32, #tpu.memory_space<vmem>>, %arg5: memref<1x1x32xf32, #tpu.memory_space<vmem>>, %arg6: memref<1x1x32xf32, #tpu.memory_space<vmem>>, %arg7: memref<1x4x32x8xbf16, #tpu.memory_space<vmem>>, %arg8: memref<1x4x32x8xbf16, #tpu.memory_space<vmem>>, %arg9: memref<1x4x32x8xbf16, #tpu.memory_space<vmem>>, %arg10: memref<1x4x8x32xbf16, #tpu.memory_space<vmem>>, %arg11: memref<1x32x64xbf16, #tpu.memory_space<vmem>>, %arg12: memref<1x1x64xf32, #tpu.memory_space<vmem>>, %arg13: memref<1x64x32xbf16, #tpu.memory_space<vmem>>, %arg14: memref<1x1x32xf32, #tpu.memory_space<vmem>>, %arg15: memref<1x1x32xf32, #tpu.memory_space<vmem>>, %arg16: memref<1x1x32xf32, #tpu.memory_space<vmem>>, %arg17: memref<8x32xf32, #tpu.memory_space<vmem>>, %arg18: memref<8x32xbf16, #tpu.memory_space<vmem>>, %arg19: memref<8x32xf32, #tpu.memory_space<vmem>>, %arg20: memref<8x32xf32, #tpu.memory_space<vmem>>) attributes {dimension_semantics = [#tpu.dimension_semantics<parallel>, #tpu.dimension_semantics<arbitrary>, #tpu.dimension_semantics<arbitrary>], iteration_bounds = array<i64: 2, 2, 1>, scalar_prefetch = 0 : i64, scratch_operands = 3 : i64, tpu.core_type = #tpu.core_type<tc>, window_params = [{transform_indices = @transform_0, window_bounds = array<i64: 8, 32>}, {transform_indices = @transform_1, window_bounds = array<i64: 1, 8, 32>}, {transform_indices = @transform_2, window_bounds = array<i64: 1, 1, 32>}, {transform_indices = @transform_3, window_bounds = array<i64: 1, 1, 32>}, {transform_indices = @transform_4, window_bounds = array<i64: 1, 4, 32, 8>}, {transform_indices = @transform_5, window_bounds = array<i64: 1, 4, 32, 8>}, {transform_indices = @transform_6, window_bounds = array<i64: 1, 4, 32, 8>}, {transform_indices = @transform_7, window_bounds = array<i64: 1, 4, 8, 32>}, {transform_indices = @transform_8, window_bounds = array<i64: 1, 32, 64>}, {transform_indices = @transform_9, window_bounds = array<i64: 1, 1, 64>}, {transform_indices = @transform_10, window_bounds = array<i64: 1, 64, 32>}, {transform_indices = @transform_11, window_bounds = array<i64: 1, 1, 32>}, {transform_indices = @transform_12, window_bounds = array<i64: 1, 1, 32>}, {transform_indices = @transform_13, window_bounds = array<i64: 1, 1, 32>}, {transform_indices = @transform_14, window_bounds = array<i64: 8, 32>}]} {
    %c0_i32 = arith.constant 0 : i32
    %0 = arith.cmpi eq, %arg1, %c0_i32 : i32
    %c0_i32_0 = arith.constant 0 : i32
    %1 = arith.cmpi eq, %arg2, %c0_i32_0 : i32
    %2 = arith.andi %0, %1 : i1
    %3 = arith.extui %2 : i1 to i32
    %c0_i32_1 = arith.constant 0 : i32
    %4 = arith.cmpi ne, %3, %c0_i32_1 : i32
    scf.if %4 {
      %c0_22 = arith.constant 0 : index
      %c0_23 = arith.constant 0 : index
      %28 = vector.load %arg3[%c0_22, %c0_23] : memref<8x32xf32, #tpu.memory_space<vmem>>, vector<8x32xf32>
      %c0_24 = arith.constant 0 : index
      %c0_25 = arith.constant 0 : index
      %29 = vector.load %arg17[%c0_24, %c0_25] : memref<8x32xf32, #tpu.memory_space<vmem>>, vector<8x32xf32>
      tpu.vector_store %arg17[%c0_24, %c0_25], %28 {strides = array<i32>} : memref<8x32xf32, #tpu.memory_space<vmem>>, vector<8x32xf32>,
    } else {
    }
    %c0_i32_2 = arith.constant 0 : i32
    %5 = arith.cmpi eq, %arg2, %c0_i32_2 : i32
    %6 = arith.extui %5 : i1 to i32
    %c0_i32_3 = arith.constant 0 : i32
    %7 = arith.cmpi ne, %6, %c0_i32_3 : i32
    scf.if %7 {
      %c0_22 = arith.constant 0 : index
      %c0_23 = arith.constant 0 : index
      %28 = vector.load %arg17[%c0_22, %c0_23] : memref<8x32xf32, #tpu.memory_space<vmem>>, vector<8x32xf32>
      %29 = vector.shape_cast %28 : vector<8x32xf32> to vector<1x8x32xf32>
      %c0_24 = arith.constant 0 : index
      %c0_25 = arith.constant 0 : index
      %c0_26 = arith.constant 0 : index
      %30 = vector.load %arg4[%c0_24, %c0_25, %c0_26] : memref<1x8x32xf32, #tpu.memory_space<vmem>>, vector<1x8x32xf32>
      %31 = vector.shape_cast %30 : vector<1x8x32xf32> to vector<8x32xf32>
      %32 = vector.shape_cast %31 : vector<8x32xf32> to vector<1x8x32xf32>
      %33 = arith.addf %29, %32 : vector<1x8x32xf32>
      %34 = vector.shape_cast %33 : vector<1x8x32xf32> to vector<8x32xf32>
      %cst_27 = arith.constant dense<0.000000e+00> : vector<8xf32>
      %35 = vector.multi_reduction <add>, %34, %cst_27 [1] : vector<8x32xf32> to vector<8xf32>
      %36 = vector.shape_cast %35 : vector<8xf32> to vector<8x1xf32>
      %cst_28 = arith.constant 3.200000e+01 : f32
      %37 = vector.broadcast %cst_28 : f32 to vector<8x1xf32>
      %38 = arith.divf %36, %37 : vector<8x1xf32>
      %39 = vector.broadcast %38 : vector<8x1xf32> to vector<8x32xf32>
      %40 = arith.subf %34, %39 : vector<8x32xf32>
      %41 = arith.mulf %40, %40 : vector<8x32xf32>
      %cst_29 = arith.constant dense<0.000000e+00> : vector<8xf32>
      %42 = vector.multi_reduction <add>, %41, %cst_29 [1] : vector<8x32xf32> to vector<8xf32>
      %43 = vector.shape_cast %42 : vector<8xf32> to vector<8x1xf32>
      %cst_30 = arith.constant 3.200000e+01 : f32
      %44 = vector.broadcast %cst_30 : f32 to vector<8x1xf32>
      %45 = arith.divf %43, %44 : vector<8x1xf32>
      %cst_31 = arith.constant 9.99999997E-7 : f32
      %46 = vector.broadcast %cst_31 : f32 to vector<8x1xf32>
      %47 = arith.addf %45, %46 : vector<8x1xf32>
      %48 = math.rsqrt %47 : vector<8x1xf32>
      %49 = vector.broadcast %48 : vector<8x1xf32> to vector<8x32xf32>
      %50 = arith.mulf %40, %49 : vector<8x32xf32>
      %c0_32 = arith.constant 0 : index
      %c0_33 = arith.constant 0 : index
      %c0_34 = arith.constant 0 : index
      %51 = vector.load %arg5[%c0_32, %c0_33, %c0_34] : memref<1x1x32xf32, #tpu.memory_space<vmem>>, vector<1x1x32xf32>
      %52 = vector.shape_cast %51 : vector<1x1x32xf32> to vector<1x32xf32>
      %53 = vector.broadcast %52 : vector<1x32xf32> to vector<8x32xf32>
      %54 = arith.mulf %50, %53 : vector<8x32xf32>
      %c0_35 = arith.constant 0 : index
      %c0_36 = arith.constant 0 : index
      %c0_37 = arith.constant 0 : index
      %55 = vector.load %arg6[%c0_35, %c0_36, %c0_37] : memref<1x1x32xf32, #tpu.memory_space<vmem>>, vector<1x1x32xf32>
      %56 = vector.shape_cast %55 : vector<1x1x32xf32> to vector<1x32xf32>
      %57 = vector.broadcast %56 : vector<1x32xf32> to vector<8x32xf32>
      %58 = arith.addf %54, %57 : vector<8x32xf32>
      %59 = arith.truncf %58 : vector<8x32xf32> to vector<8x32xbf16>
      %c0_38 = arith.constant 0 : index
      %c0_39 = arith.constant 0 : index
      %60 = vector.load %arg18[%c0_38, %c0_39] : memref<8x32xbf16, #tpu.memory_space<vmem>>, vector<8x32xbf16>
      tpu.vector_store %arg18[%c0_38, %c0_39], %59 {strides = array<i32>} : memref<8x32xbf16, #tpu.memory_space<vmem>>, vector<8x32xbf16>,
      %c0_40 = arith.constant 0 : index
      %c0_41 = arith.constant 0 : index
      %c0_42 = arith.constant 0 : index
      %c0_43 = arith.constant 0 : index
      %61 = vector.load %arg7[%c0_40, %c0_41, %c0_42, %c0_43] : memref<1x4x32x8xbf16, #tpu.memory_space<vmem>>, vector<1x1x32x8xbf16>
      %62 = vector.shape_cast %61 : vector<1x1x32x8xbf16> to vector<32x8xbf16>
      %cst_44 = arith.constant dense<0.000000e+00> : vector<8x8xf32>
      %63 = tpu.matmul %59, %62, %cst_44 {dimension_numbers = #tpu.dot_dimension_numbers<[1], [0], [0], [1], [0, 0, 1, 1], [], []>} : vector<8x32xbf16>, vector<32x8xbf16>, vector<8x8xf32> -> vector<8x8xf32>
      %c0_45 = arith.constant 0 : index
      %c0_46 = arith.constant 0 : index
      %c0_47 = arith.constant 0 : index
      %c0_48 = arith.constant 0 : index
      %64 = vector.load %arg8[%c0_45, %c0_46, %c0_47, %c0_48] : memref<1x4x32x8xbf16, #tpu.memory_space<vmem>>, vector<1x1x32x8xbf16>
      %65 = vector.shape_cast %64 : vector<1x1x32x8xbf16> to vector<32x8xbf16>
      %cst_49 = arith.constant dense<0.000000e+00> : vector<8x8xf32>
      %66 = tpu.matmul %59, %65, %cst_49 {dimension_numbers = #tpu.dot_dimension_numbers<[1], [0], [0], [1], [0, 0, 1, 1], [], []>} : vector<8x32xbf16>, vector<32x8xbf16>, vector<8x8xf32> -> vector<8x8xf32>
      %c0_50 = arith.constant 0 : index
      %c0_51 = arith.constant 0 : index
      %c0_52 = arith.constant 0 : index
      %c0_53 = arith.constant 0 : index
      %67 = vector.load %arg9[%c0_50, %c0_51, %c0_52, %c0_53] : memref<1x4x32x8xbf16, #tpu.memory_space<vmem>>, vector<1x1x32x8xbf16>
      %68 = vector.shape_cast %67 : vector<1x1x32x8xbf16> to vector<32x8xbf16>
      %cst_54 = arith.constant dense<0.000000e+00> : vector<8x8xf32>
      %69 = tpu.matmul %59, %68, %cst_54 {dimension_numbers = #tpu.dot_dimension_numbers<[1], [0], [0], [1], [0, 0, 1, 1], [], []>} : vector<8x32xbf16>, vector<32x8xbf16>, vector<8x8xf32> -> vector<8x8xf32>
      %70 = vector.shape_cast %63 : vector<8x8xf32> to vector<1x8x8xf32>
      %71 = arith.truncf %70 : vector<1x8x8xf32> to vector<1x8x8xbf16>
      %72 = vector.shape_cast %66 : vector<8x8xf32> to vector<1x8x8xf32>
      %73 = arith.truncf %72 : vector<1x8x8xf32> to vector<1x8x8xbf16>
      %74 = vector.shape_cast %69 : vector<8x8xf32> to vector<1x8x8xf32>
      %75 = arith.truncf %74 : vector<1x8x8xf32> to vector<1x8x8xbf16>
      "tpu.trace_start"() <{level = 10 : i32, message = "bqd,bkd->bqk"}> : () -> ()
      %cst_55 = arith.constant dense<0.000000e+00> : vector<1x8x8xf32>
      %76 = tpu.matmul %71, %73, %cst_55 {dimension_numbers = #tpu.dot_dimension_numbers<[2], [2], [1], [1], [0, 0, 0, 1, 1, 1], [0], [0]>} : vector<1x8x8xbf16>, vector<1x8x8xbf16>, vector<1x8x8xf32> -> vector<1x8x8xf32>
      "tpu.trace_stop"() : () -> ()
      %cst_56 = arith.constant dense<0xFF800000> : vector<1x8xf32>
      %77 = vector.multi_reduction <maximumf>, %76, %cst_56 [2] : vector<1x8x8xf32> to vector<1x8xf32>
      %78 = vector.shape_cast %77 : vector<1x8xf32> to vector<1x8x1xf32>
      %79 = vector.broadcast %78 : vector<1x8x1xf32> to vector<1x8x8xf32>
      %80 = arith.subf %76, %79 : vector<1x8x8xf32>
      %81 = math.exp %80 : vector<1x8x8xf32>
      %cst_57 = arith.constant dense<0.000000e+00> : vector<1x8xf32>
      %82 = vector.multi_reduction <add>, %81, %cst_57 [2] : vector<1x8x8xf32> to vector<1x8xf32>
      %83 = vector.shape_cast %82 : vector<1x8xf32> to vector<1x8x1xf32>
      %84 = tpu.reciprocal %83 {approx = true} : vector<1x8x1xf32> -> vector<1x8x1xf32>
      %85 = vector.broadcast %84 : vector<1x8x1xf32> to vector<1x8x8xf32>
      %86 = arith.mulf %81, %85 : vector<1x8x8xf32>
      %87 = arith.truncf %86 : vector<1x8x8xf32> to vector<1x8x8xbf16>
      "tpu.trace_start"() <{level = 10 : i32, message = "bqk,bkd->bqd"}> : () -> ()
      %cst_58 = arith.constant dense<0.000000e+00> : vector<1x8x8xf32>
      %88 = tpu.matmul %87, %75, %cst_58 {dimension_numbers = #tpu.dot_dimension_numbers<[2], [1], [1], [2], [0, 0, 0, 1, 1, 2], [0], [0]>} : vector<1x8x8xbf16>, vector<1x8x8xbf16>, vector<1x8x8xf32> -> vector<1x8x8xf32>
      "tpu.trace_stop"() : () -> ()
      %89 = vector.shape_cast %88 : vector<1x8x8xf32> to vector<8x8xf32>
      %90 = arith.truncf %89 : vector<8x8xf32> to vector<8x8xbf16>
      %c0_59 = arith.constant 0 : index
      %c0_60 = arith.constant 0 : index
      %c0_61 = arith.constant 0 : index
      %c0_62 = arith.constant 0 : index
      %91 = vector.load %arg10[%c0_59, %c0_60, %c0_61, %c0_62] : memref<1x4x8x32xbf16, #tpu.memory_space<vmem>>, vector<1x1x8x32xbf16>
      %92 = vector.shape_cast %91 : vector<1x1x8x32xbf16> to vector<8x32xbf16>
      %cst_63 = arith.constant dense<0.000000e+00> : vector<8x32xf32>
      %93 = tpu.matmul %90, %92, %cst_63 {dimension_numbers = #tpu.dot_dimension_numbers<[1], [0], [0], [1], [0, 0, 1, 1], [], []>} : vector<8x8xbf16>, vector<8x32xbf16>, vector<8x32xf32> -> vector<8x32xf32>
      %94 = arith.addf %34, %93 : vector<8x32xf32>
      %c0_64 = arith.constant 0 : index
      %c1 = arith.constant 1 : index
      %c0_65 = arith.constant 0 : index
      %c0_66 = arith.constant 0 : index
      %95 = vector.load %arg7[%c0_64, %c1, %c0_65, %c0_66] : memref<1x4x32x8xbf16, #tpu.memory_space<vmem>>, vector<1x1x32x8xbf16>
      %96 = vector.shape_cast %95 : vector<1x1x32x8xbf16> to vector<32x8xbf16>
      %cst_67 = arith.constant dense<0.000000e+00> : vector<8x8xf32>
      %97 = tpu.matmul %59, %96, %cst_67 {dimension_numbers = #tpu.dot_dimension_numbers<[1], [0], [0], [1], [0, 0, 1, 1], [], []>} : vector<8x32xbf16>, vector<32x8xbf16>, vector<8x8xf32> -> vector<8x8xf32>
      %c0_68 = arith.constant 0 : index
      %c1_69 = arith.constant 1 : index
      %c0_70 = arith.constant 0 : index
      %c0_71 = arith.constant 0 : index
      %98 = vector.load %arg8[%c0_68, %c1_69, %c0_70, %c0_71] : memref<1x4x32x8xbf16, #tpu.memory_space<vmem>>, vector<1x1x32x8xbf16>
      %99 = vector.shape_cast %98 : vector<1x1x32x8xbf16> to vector<32x8xbf16>
      %cst_72 = arith.constant dense<0.000000e+00> : vector<8x8xf32>
      %100 = tpu.matmul %59, %99, %cst_72 {dimension_numbers = #tpu.dot_dimension_numbers<[1], [0], [0], [1], [0, 0, 1, 1], [], []>} : vector<8x32xbf16>, vector<32x8xbf16>, vector<8x8xf32> -> vector<8x8xf32>
      %c0_73 = arith.constant 0 : index
      %c1_74 = arith.constant 1 : index
      %c0_75 = arith.constant 0 : index
      %c0_76 = arith.constant 0 : index
      %101 = vector.load %arg9[%c0_73, %c1_74, %c0_75, %c0_76] : memref<1x4x32x8xbf16, #tpu.memory_space<vmem>>, vector<1x1x32x8xbf16>
      %102 = vector.shape_cast %101 : vector<1x1x32x8xbf16> to vector<32x8xbf16>
      %cst_77 = arith.constant dense<0.000000e+00> : vector<8x8xf32>
      %103 = tpu.matmul %59, %102, %cst_77 {dimension_numbers = #tpu.dot_dimension_numbers<[1], [0], [0], [1], [0, 0, 1, 1], [], []>} : vector<8x32xbf16>, vector<32x8xbf16>, vector<8x8xf32> -> vector<8x8xf32>
      %104 = vector.shape_cast %97 : vector<8x8xf32> to vector<1x8x8xf32>
      %105 = arith.truncf %104 : vector<1x8x8xf32> to vector<1x8x8xbf16>
      %106 = vector.shape_cast %100 : vector<8x8xf32> to vector<1x8x8xf32>
      %107 = arith.truncf %106 : vector<1x8x8xf32> to vector<1x8x8xbf16>
      %108 = vector.shape_cast %103 : vector<8x8xf32> to vector<1x8x8xf32>
      %109 = arith.truncf %108 : vector<1x8x8xf32> to vector<1x8x8xbf16>
      "tpu.trace_start"() <{level = 10 : i32, message = "bqd,bkd->bqk"}> : () -> ()
      %cst_78 = arith.constant dense<0.000000e+00> : vector<1x8x8xf32>
      %110 = tpu.matmul %105, %107, %cst_78 {dimension_numbers = #tpu.dot_dimension_numbers<[2], [2], [1], [1], [0, 0, 0, 1, 1, 1], [0], [0]>} : vector<1x8x8xbf16>, vector<1x8x8xbf16>, vector<1x8x8xf32> -> vector<1x8x8xf32>
      "tpu.trace_stop"() : () -> ()
      %cst_79 = arith.constant dense<0xFF800000> : vector<1x8xf32>
      %111 = vector.multi_reduction <maximumf>, %110, %cst_79 [2] : vector<1x8x8xf32> to vector<1x8xf32>
      %112 = vector.shape_cast %111 : vector<1x8xf32> to vector<1x8x1xf32>
      %113 = vector.broadcast %112 : vector<1x8x1xf32> to vector<1x8x8xf32>
      %114 = arith.subf %110, %113 : vector<1x8x8xf32>
      %115 = math.exp %114 : vector<1x8x8xf32>
      %cst_80 = arith.constant dense<0.000000e+00> : vector<1x8xf32>
      %116 = vector.multi_reduction <add>, %115, %cst_80 [2] : vector<1x8x8xf32> to vector<1x8xf32>
      %117 = vector.shape_cast %116 : vector<1x8xf32> to vector<1x8x1xf32>
      %118 = tpu.reciprocal %117 {approx = true} : vector<1x8x1xf32> -> vector<1x8x1xf32>
      %119 = vector.broadcast %118 : vector<1x8x1xf32> to vector<1x8x8xf32>
      %120 = arith.mulf %115, %119 : vector<1x8x8xf32>
      %121 = arith.truncf %120 : vector<1x8x8xf32> to vector<1x8x8xbf16>
      "tpu.trace_start"() <{level = 10 : i32, message = "bqk,bkd->bqd"}> : () -> ()
      %cst_81 = arith.constant dense<0.000000e+00> : vector<1x8x8xf32>
      %122 = tpu.matmul %121, %109, %cst_81 {dimension_numbers = #tpu.dot_dimension_numbers<[2], [1], [1], [2], [0, 0, 0, 1, 1, 2], [0], [0]>} : vector<1x8x8xbf16>, vector<1x8x8xbf16>, vector<1x8x8xf32> -> vector<1x8x8xf32>
      "tpu.trace_stop"() : () -> ()
      %123 = vector.shape_cast %122 : vector<1x8x8xf32> to vector<8x8xf32>
      %124 = arith.truncf %123 : vector<8x8xf32> to vector<8x8xbf16>
      %c0_82 = arith.constant 0 : index
      %c1_83 = arith.constant 1 : index
      %c0_84 = arith.constant 0 : index
      %c0_85 = arith.constant 0 : index
      %125 = vector.load %arg10[%c0_82, %c1_83, %c0_84, %c0_85] : memref<1x4x8x32xbf16, #tpu.memory_space<vmem>>, vector<1x1x8x32xbf16>
      %126 = vector.shape_cast %125 : vector<1x1x8x32xbf16> to vector<8x32xbf16>
      %cst_86 = arith.constant dense<0.000000e+00> : vector<8x32xf32>
      %127 = tpu.matmul %124, %126, %cst_86 {dimension_numbers = #tpu.dot_dimension_numbers<[1], [0], [0], [1], [0, 0, 1, 1], [], []>} : vector<8x8xbf16>, vector<8x32xbf16>, vector<8x32xf32> -> vector<8x32xf32>
      %128 = arith.addf %94, %127 : vector<8x32xf32>
      %c0_87 = arith.constant 0 : index
      %c2 = arith.constant 2 : index
      %c0_88 = arith.constant 0 : index
      %c0_89 = arith.constant 0 : index
      %129 = vector.load %arg7[%c0_87, %c2, %c0_88, %c0_89] : memref<1x4x32x8xbf16, #tpu.memory_space<vmem>>, vector<1x1x32x8xbf16>
      %130 = vector.shape_cast %129 : vector<1x1x32x8xbf16> to vector<32x8xbf16>
      %cst_90 = arith.constant dense<0.000000e+00> : vector<8x8xf32>
      %131 = tpu.matmul %59, %130, %cst_90 {dimension_numbers = #tpu.dot_dimension_numbers<[1], [0], [0], [1], [0, 0, 1, 1], [], []>} : vector<8x32xbf16>, vector<32x8xbf16>, vector<8x8xf32> -> vector<8x8xf32>
      %c0_91 = arith.constant 0 : index
      %c2_92 = arith.constant 2 : index
      %c0_93 = arith.constant 0 : index
      %c0_94 = arith.constant 0 : index
      %132 = vector.load %arg8[%c0_91, %c2_92, %c0_93, %c0_94] : memref<1x4x32x8xbf16, #tpu.memory_space<vmem>>, vector<1x1x32x8xbf16>
      %133 = vector.shape_cast %132 : vector<1x1x32x8xbf16> to vector<32x8xbf16>
      %cst_95 = arith.constant dense<0.000000e+00> : vector<8x8xf32>
      %134 = tpu.matmul %59, %133, %cst_95 {dimension_numbers = #tpu.dot_dimension_numbers<[1], [0], [0], [1], [0, 0, 1, 1], [], []>} : vector<8x32xbf16>, vector<32x8xbf16>, vector<8x8xf32> -> vector<8x8xf32>
      %c0_96 = arith.constant 0 : index
      %c2_97 = arith.constant 2 : index
      %c0_98 = arith.constant 0 : index
      %c0_99 = arith.constant 0 : index
      %135 = vector.load %arg9[%c0_96, %c2_97, %c0_98, %c0_99] : memref<1x4x32x8xbf16, #tpu.memory_space<vmem>>, vector<1x1x32x8xbf16>
      %136 = vector.shape_cast %135 : vector<1x1x32x8xbf16> to vector<32x8xbf16>
      %cst_100 = arith.constant dense<0.000000e+00> : vector<8x8xf32>
      %137 = tpu.matmul %59, %136, %cst_100 {dimension_numbers = #tpu.dot_dimension_numbers<[1], [0], [0], [1], [0, 0, 1, 1], [], []>} : vector<8x32xbf16>, vector<32x8xbf16>, vector<8x8xf32> -> vector<8x8xf32>
      %138 = vector.shape_cast %131 : vector<8x8xf32> to vector<1x8x8xf32>
      %139 = arith.truncf %138 : vector<1x8x8xf32> to vector<1x8x8xbf16>
      %140 = vector.shape_cast %134 : vector<8x8xf32> to vector<1x8x8xf32>
      %141 = arith.truncf %140 : vector<1x8x8xf32> to vector<1x8x8xbf16>
      %142 = vector.shape_cast %137 : vector<8x8xf32> to vector<1x8x8xf32>
      %143 = arith.truncf %142 : vector<1x8x8xf32> to vector<1x8x8xbf16>
      "tpu.trace_start"() <{level = 10 : i32, message = "bqd,bkd->bqk"}> : () -> ()
      %cst_101 = arith.constant dense<0.000000e+00> : vector<1x8x8xf32>
      %144 = tpu.matmul %139, %141, %cst_101 {dimension_numbers = #tpu.dot_dimension_numbers<[2], [2], [1], [1], [0, 0, 0, 1, 1, 1], [0], [0]>} : vector<1x8x8xbf16>, vector<1x8x8xbf16>, vector<1x8x8xf32> -> vector<1x8x8xf32>
      "tpu.trace_stop"() : () -> ()
      %cst_102 = arith.constant dense<0xFF800000> : vector<1x8xf32>
      %145 = vector.multi_reduction <maximumf>, %144, %cst_102 [2] : vector<1x8x8xf32> to vector<1x8xf32>
      %146 = vector.shape_cast %145 : vector<1x8xf32> to vector<1x8x1xf32>
      %147 = vector.broadcast %146 : vector<1x8x1xf32> to vector<1x8x8xf32>
      %148 = arith.subf %144, %147 : vector<1x8x8xf32>
      %149 = math.exp %148 : vector<1x8x8xf32>
      %cst_103 = arith.constant dense<0.000000e+00> : vector<1x8xf32>
      %150 = vector.multi_reduction <add>, %149, %cst_103 [2] : vector<1x8x8xf32> to vector<1x8xf32>
      %151 = vector.shape_cast %150 : vector<1x8xf32> to vector<1x8x1xf32>
      %152 = tpu.reciprocal %151 {approx = true} : vector<1x8x1xf32> -> vector<1x8x1xf32>
      %153 = vector.broadcast %152 : vector<1x8x1xf32> to vector<1x8x8xf32>
      %154 = arith.mulf %149, %153 : vector<1x8x8xf32>
      %155 = arith.truncf %154 : vector<1x8x8xf32> to vector<1x8x8xbf16>
      "tpu.trace_start"() <{level = 10 : i32, message = "bqk,bkd->bqd"}> : () -> ()
      %cst_104 = arith.constant dense<0.000000e+00> : vector<1x8x8xf32>
      %156 = tpu.matmul %155, %143, %cst_104 {dimension_numbers = #tpu.dot_dimension_numbers<[2], [1], [1], [2], [0, 0, 0, 1, 1, 2], [0], [0]>} : vector<1x8x8xbf16>, vector<1x8x8xbf16>, vector<1x8x8xf32> -> vector<1x8x8xf32>
      "tpu.trace_stop"() : () -> ()
      %157 = vector.shape_cast %156 : vector<1x8x8xf32> to vector<8x8xf32>
      %158 = arith.truncf %157 : vector<8x8xf32> to vector<8x8xbf16>
      %c0_105 = arith.constant 0 : index
      %c2_106 = arith.constant 2 : index
      %c0_107 = arith.constant 0 : index
      %c0_108 = arith.constant 0 : index
      %159 = vector.load %arg10[%c0_105, %c2_106, %c0_107, %c0_108] : memref<1x4x8x32xbf16, #tpu.memory_space<vmem>>, vector<1x1x8x32xbf16>
      %160 = vector.shape_cast %159 : vector<1x1x8x32xbf16> to vector<8x32xbf16>
      %cst_109 = arith.constant dense<0.000000e+00> : vector<8x32xf32>
      %161 = tpu.matmul %158, %160, %cst_109 {dimension_numbers = #tpu.dot_dimension_numbers<[1], [0], [0], [1], [0, 0, 1, 1], [], []>} : vector<8x8xbf16>, vector<8x32xbf16>, vector<8x32xf32> -> vector<8x32xf32>
      %162 = arith.addf %128, %161 : vector<8x32xf32>
      %c0_110 = arith.constant 0 : index
      %c3 = arith.constant 3 : index
      %c0_111 = arith.constant 0 : index
      %c0_112 = arith.constant 0 : index
      %163 = vector.load %arg7[%c0_110, %c3, %c0_111, %c0_112] : memref<1x4x32x8xbf16, #tpu.memory_space<vmem>>, vector<1x1x32x8xbf16>
      %164 = vector.shape_cast %163 : vector<1x1x32x8xbf16> to vector<32x8xbf16>
      %cst_113 = arith.constant dense<0.000000e+00> : vector<8x8xf32>
      %165 = tpu.matmul %59, %164, %cst_113 {dimension_numbers = #tpu.dot_dimension_numbers<[1], [0], [0], [1], [0, 0, 1, 1], [], []>} : vector<8x32xbf16>, vector<32x8xbf16>, vector<8x8xf32> -> vector<8x8xf32>
      %c0_114 = arith.constant 0 : index
      %c3_115 = arith.constant 3 : index
      %c0_116 = arith.constant 0 : index
      %c0_117 = arith.constant 0 : index
      %166 = vector.load %arg8[%c0_114, %c3_115, %c0_116, %c0_117] : memref<1x4x32x8xbf16, #tpu.memory_space<vmem>>, vector<1x1x32x8xbf16>
      %167 = vector.shape_cast %166 : vector<1x1x32x8xbf16> to vector<32x8xbf16>
      %cst_118 = arith.constant dense<0.000000e+00> : vector<8x8xf32>
      %168 = tpu.matmul %59, %167, %cst_118 {dimension_numbers = #tpu.dot_dimension_numbers<[1], [0], [0], [1], [0, 0, 1, 1], [], []>} : vector<8x32xbf16>, vector<32x8xbf16>, vector<8x8xf32> -> vector<8x8xf32>
      %c0_119 = arith.constant 0 : index
      %c3_120 = arith.constant 3 : index
      %c0_121 = arith.constant 0 : index
      %c0_122 = arith.constant 0 : index
      %169 = vector.load %arg9[%c0_119, %c3_120, %c0_121, %c0_122] : memref<1x4x32x8xbf16, #tpu.memory_space<vmem>>, vector<1x1x32x8xbf16>
      %170 = vector.shape_cast %169 : vector<1x1x32x8xbf16> to vector<32x8xbf16>
      %cst_123 = arith.constant dense<0.000000e+00> : vector<8x8xf32>
      %171 = tpu.matmul %59, %170, %cst_123 {dimension_numbers = #tpu.dot_dimension_numbers<[1], [0], [0], [1], [0, 0, 1, 1], [], []>} : vector<8x32xbf16>, vector<32x8xbf16>, vector<8x8xf32> -> vector<8x8xf32>
      %172 = vector.shape_cast %165 : vector<8x8xf32> to vector<1x8x8xf32>
      %173 = arith.truncf %172 : vector<1x8x8xf32> to vector<1x8x8xbf16>
      %174 = vector.shape_cast %168 : vector<8x8xf32> to vector<1x8x8xf32>
      %175 = arith.truncf %174 : vector<1x8x8xf32> to vector<1x8x8xbf16>
      %176 = vector.shape_cast %171 : vector<8x8xf32> to vector<1x8x8xf32>
      %177 = arith.truncf %176 : vector<1x8x8xf32> to vector<1x8x8xbf16>
      "tpu.trace_start"() <{level = 10 : i32, message = "bqd,bkd->bqk"}> : () -> ()
      %cst_124 = arith.constant dense<0.000000e+00> : vector<1x8x8xf32>
      %178 = tpu.matmul %173, %175, %cst_124 {dimension_numbers = #tpu.dot_dimension_numbers<[2], [2], [1], [1], [0, 0, 0, 1, 1, 1], [0], [0]>} : vector<1x8x8xbf16>, vector<1x8x8xbf16>, vector<1x8x8xf32> -> vector<1x8x8xf32>
      "tpu.trace_stop"() : () -> ()
      %cst_125 = arith.constant dense<0xFF800000> : vector<1x8xf32>
      %179 = vector.multi_reduction <maximumf>, %178, %cst_125 [2] : vector<1x8x8xf32> to vector<1x8xf32>
      %180 = vector.shape_cast %179 : vector<1x8xf32> to vector<1x8x1xf32>
      %181 = vector.broadcast %180 : vector<1x8x1xf32> to vector<1x8x8xf32>
      %182 = arith.subf %178, %181 : vector<1x8x8xf32>
      %183 = math.exp %182 : vector<1x8x8xf32>
      %cst_126 = arith.constant dense<0.000000e+00> : vector<1x8xf32>
      %184 = vector.multi_reduction <add>, %183, %cst_126 [2] : vector<1x8x8xf32> to vector<1x8xf32>
      %185 = vector.shape_cast %184 : vector<1x8xf32> to vector<1x8x1xf32>
      %186 = tpu.reciprocal %185 {approx = true} : vector<1x8x1xf32> -> vector<1x8x1xf32>
      %187 = vector.broadcast %186 : vector<1x8x1xf32> to vector<1x8x8xf32>
      %188 = arith.mulf %183, %187 : vector<1x8x8xf32>
      %189 = arith.truncf %188 : vector<1x8x8xf32> to vector<1x8x8xbf16>
      "tpu.trace_start"() <{level = 10 : i32, message = "bqk,bkd->bqd"}> : () -> ()
      %cst_127 = arith.constant dense<0.000000e+00> : vector<1x8x8xf32>
      %190 = tpu.matmul %189, %177, %cst_127 {dimension_numbers = #tpu.dot_dimension_numbers<[2], [1], [1], [2], [0, 0, 0, 1, 1, 2], [0], [0]>} : vector<1x8x8xbf16>, vector<1x8x8xbf16>, vector<1x8x8xf32> -> vector<1x8x8xf32>
      "tpu.trace_stop"() : () -> ()
      %191 = vector.shape_cast %190 : vector<1x8x8xf32> to vector<8x8xf32>
      %192 = arith.truncf %191 : vector<8x8xf32> to vector<8x8xbf16>
      %c0_128 = arith.constant 0 : index
      %c3_129 = arith.constant 3 : index
      %c0_130 = arith.constant 0 : index
      %c0_131 = arith.constant 0 : index
      %193 = vector.load %arg10[%c0_128, %c3_129, %c0_130, %c0_131] : memref<1x4x8x32xbf16, #tpu.memory_space<vmem>>, vector<1x1x8x32xbf16>
      %194 = vector.shape_cast %193 : vector<1x1x8x32xbf16> to vector<8x32xbf16>
      %cst_132 = arith.constant dense<0.000000e+00> : vector<8x32xf32>
      %195 = tpu.matmul %192, %194, %cst_132 {dimension_numbers = #tpu.dot_dimension_numbers<[1], [0], [0], [1], [0, 0, 1, 1], [], []>} : vector<8x8xbf16>, vector<8x32xbf16>, vector<8x32xf32> -> vector<8x32xf32>
      %196 = arith.addf %162, %195 : vector<8x32xf32>
      %c0_133 = arith.constant 0 : index
      %c0_134 = arith.constant 0 : index
      %197 = vector.load %arg19[%c0_133, %c0_134] : memref<8x32xf32, #tpu.memory_space<vmem>>, vector<8x32xf32>
      tpu.vector_store %arg19[%c0_133, %c0_134], %196 {strides = array<i32>} : memref<8x32xf32, #tpu.memory_space<vmem>>, vector<8x32xf32>,
      %c0_135 = arith.constant 0 : index
      %c0_136 = arith.constant 0 : index
      %c0_137 = arith.constant 0 : index
      %198 = vector.load %arg14[%c0_135, %c0_136, %c0_137] : memref<1x1x32xf32, #tpu.memory_space<vmem>>, vector<1x1x32xf32>
      %199 = vector.shape_cast %198 : vector<1x1x32xf32> to vector<1x32xf32>
      %200 = vector.shape_cast %199 : vector<1x32xf32> to vector<1x32xf32>
      %201 = vector.broadcast %200 : vector<1x32xf32> to vector<8x32xf32>
      %c0_138 = arith.constant 0 : index
      %c0_139 = arith.constant 0 : index
      %202 = vector.load %arg20[%c0_138, %c0_139] : memref<8x32xf32, #tpu.memory_space<vmem>>, vector<8x32xf32>
      tpu.vector_store %arg20[%c0_138, %c0_139], %201 {strides = array<i32>} : memref<8x32xf32, #tpu.memory_space<vmem>>, vector<8x32xf32>,
    } else {
    }
    %c0 = arith.constant 0 : index
    %c0_4 = arith.constant 0 : index
    %8 = vector.load %arg18[%c0, %c0_4] : memref<8x32xbf16, #tpu.memory_space<vmem>>, vector<8x32xbf16>
    %c0_5 = arith.constant 0 : index
    %c0_6 = arith.constant 0 : index
    %c0_7 = arith.constant 0 : index
    %9 = vector.load %arg11[%c0_5, %c0_6, %c0_7] : memref<1x32x64xbf16, #tpu.memory_space<vmem>>, vector<1x32x64xbf16>
    %10 = vector.shape_cast %9 : vector<1x32x64xbf16> to vector<32x64xbf16>
    %cst = arith.constant dense<0.000000e+00> : vector<8x64xf32>
    %11 = tpu.matmul %8, %10, %cst {dimension_numbers = #tpu.dot_dimension_numbers<[1], [0], [0], [1], [0, 0, 1, 1], [], []>} : vector<8x32xbf16>, vector<32x64xbf16>, vector<8x64xf32> -> vector<8x64xf32>
    %c0_8 = arith.constant 0 : index
    %c0_9 = arith.constant 0 : index
    %c0_10 = arith.constant 0 : index
    %12 = vector.load %arg12[%c0_8, %c0_9, %c0_10] : memref<1x1x64xf32, #tpu.memory_space<vmem>>, vector<1x1x64xf32>
    %13 = vector.shape_cast %12 : vector<1x1x64xf32> to vector<1x64xf32>
    %14 = vector.broadcast %13 : vector<1x64xf32> to vector<8x64xf32>
    %15 = arith.addf %11, %14 : vector<8x64xf32>
    %cst_11 = arith.constant 0.000000e+00 : f32
    %16 = vector.broadcast %cst_11 : f32 to vector<8x64xf32>
    %17 = arith.maximumf %15, %16 : vector<8x64xf32>
    %18 = arith.truncf %17 : vector<8x64xf32> to vector<8x64xbf16>
    %c0_12 = arith.constant 0 : index
    %c0_13 = arith.constant 0 : index
    %19 = vector.load %arg20[%c0_12, %c0_13] : memref<8x32xf32, #tpu.memory_space<vmem>>, vector<8x32xf32>
    %c0_14 = arith.constant 0 : index
    %c0_15 = arith.constant 0 : index
    %c0_16 = arith.constant 0 : index
    %20 = vector.load %arg13[%c0_14, %c0_15, %c0_16] : memref<1x64x32xbf16, #tpu.memory_space<vmem>>, vector<1x64x32xbf16>
    %21 = vector.shape_cast %20 : vector<1x64x32xbf16> to vector<64x32xbf16>
    %cst_17 = arith.constant dense<0.000000e+00> : vector<8x32xf32>
    %22 = tpu.matmul %18, %21, %cst_17 {dimension_numbers = #tpu.dot_dimension_numbers<[1], [0], [0], [1], [0, 0, 1, 1], [], []>} : vector<8x64xbf16>, vector<64x32xbf16>, vector<8x32xf32> -> vector<8x32xf32>
    %23 = arith.addf %19, %22 : vector<8x32xf32>
    %c0_18 = arith.constant 0 : index
    %c0_19 = arith.constant 0 : index
    %24 = vector.load %arg20[%c0_18, %c0_19] : memref<8x32xf32, #tpu.memory_space<vmem>>, vector<8x32xf32>
    tpu.vector_store %arg20[%c0_18, %c0_19], %23 {strides = array<i32>} : memref<8x32xf32, #tpu.memory_space<vmem>>, vector<8x32xf32>,
    %c0_i32_20 = arith.constant 0 : i32
    %25 = arith.cmpi eq, %arg2, %c0_i32_20 : i32
    %26 = arith.extui %25 : i1 to i32
    %c0_i32_21 = arith.constant 0 : i32
    %27 = arith.cmpi ne, %26, %c0_i32_21 : i32
    scf.if %27 {
      %c0_22 = arith.constant 0 : index
      %c0_23 = arith.constant 0 : index
      %28 = vector.load %arg20[%c0_22, %c0_23] : memref<8x32xf32, #tpu.memory_space<vmem>>, vector<8x32xf32>
      %cst_24 = arith.constant dense<0.000000e+00> : vector<8xf32>
      %29 = vector.multi_reduction <add>, %28, %cst_24 [1] : vector<8x32xf32> to vector<8xf32>
      %30 = vector.shape_cast %29 : vector<8xf32> to vector<8x1xf32>
      %cst_25 = arith.constant 3.200000e+01 : f32
      %31 = vector.broadcast %cst_25 : f32 to vector<8x1xf32>
      %32 = arith.divf %30, %31 : vector<8x1xf32>
      %33 = vector.broadcast %32 : vector<8x1xf32> to vector<8x32xf32>
      %34 = arith.subf %28, %33 : vector<8x32xf32>
      %35 = arith.mulf %34, %34 : vector<8x32xf32>
      %cst_26 = arith.constant dense<0.000000e+00> : vector<8xf32>
      %36 = vector.multi_reduction <add>, %35, %cst_26 [1] : vector<8x32xf32> to vector<8xf32>
      %37 = vector.shape_cast %36 : vector<8xf32> to vector<8x1xf32>
      %cst_27 = arith.constant 3.200000e+01 : f32
      %38 = vector.broadcast %cst_27 : f32 to vector<8x1xf32>
      %39 = arith.divf %37, %38 : vector<8x1xf32>
      %cst_28 = arith.constant 9.99999997E-7 : f32
      %40 = vector.broadcast %cst_28 : f32 to vector<8x1xf32>
      %41 = arith.addf %39, %40 : vector<8x1xf32>
      %42 = math.rsqrt %41 : vector<8x1xf32>
      %43 = vector.broadcast %42 : vector<8x1xf32> to vector<8x32xf32>
      %44 = arith.mulf %34, %43 : vector<8x32xf32>
      %c0_29 = arith.constant 0 : index
      %c0_30 = arith.constant 0 : index
      %c0_31 = arith.constant 0 : index
      %45 = vector.load %arg15[%c0_29, %c0_30, %c0_31] : memref<1x1x32xf32, #tpu.memory_space<vmem>>, vector<1x1x32xf32>
      %46 = vector.shape_cast %45 : vector<1x1x32xf32> to vector<1x32xf32>
      %47 = vector.broadcast %46 : vector<1x32xf32> to vector<8x32xf32>
      %48 = arith.mulf %44, %47 : vector<8x32xf32>
      %c0_32 = arith.constant 0 : index
      %c0_33 = arith.constant 0 : index
      %c0_34 = arith.constant 0 : index
      %49 = vector.load %arg16[%c0_32, %c0_33, %c0_34] : memref<1x1x32xf32, #tpu.memory_space<vmem>>, vector<1x1x32xf32>
      %50 = vector.shape_cast %49 : vector<1x1x32xf32> to vector<1x32xf32>
      %51 = vector.broadcast %50 : vector<1x32xf32> to vector<8x32xf32>
      %52 = arith.addf %48, %51 : vector<8x32xf32>
      %c0_35 = arith.constant 0 : index
      %c0_36 = arith.constant 0 : index
      %53 = vector.load %arg19[%c0_35, %c0_36] : memref<8x32xf32, #tpu.memory_space<vmem>>, vector<8x32xf32>
      %54 = arith.addf %53, %52 : vector<8x32xf32>
      %c0_37 = arith.constant 0 : index
      %c0_38 = arith.constant 0 : index
      %55 = vector.load %arg17[%c0_37, %c0_38] : memref<8x32xf32, #tpu.memory_space<vmem>>, vector<8x32xf32>
      tpu.vector_store %arg17[%c0_37, %c0_38], %54 {strides = array<i32>} : memref<8x32xf32, #tpu.memory_space<vmem>>, vector<8x32xf32>,
    } else {
    }
    return
  }
  func.func @transform_0(%arg0: i32, %arg1: i32, %arg2: i32) -> (i32, i32) {
    %c0_i32 = arith.constant 0 : i32
    %c0_i32_0 = arith.constant 0 : i32
    return %arg0, %c0_i32 : i32, i32
  }
  func.func @transform_1(%arg0: i32, %arg1: i32, %arg2: i32) -> (i32, i32, i32) {
    %c0_i32 = arith.constant 0 : i32
    %c0_i32_0 = arith.constant 0 : i32
    %c0_i32_1 = arith.constant 0 : i32
    return %arg1, %c0_i32, %c0_i32_0 : i32, i32, i32
  }
  func.func @transform_2(%arg0: i32, %arg1: i32, %arg2: i32) -> (i32, i32, i32) {
    %c0_i32 = arith.constant 0 : i32
    %c0_i32_0 = arith.constant 0 : i32
    %c0_i32_1 = arith.constant 0 : i32
    return %arg1, %c0_i32, %c0_i32_0 : i32, i32, i32
  }
  func.func @transform_3(%arg0: i32, %arg1: i32, %arg2: i32) -> (i32, i32, i32) {
    %c0_i32 = arith.constant 0 : i32
    %c0_i32_0 = arith.constant 0 : i32
    %c0_i32_1 = arith.constant 0 : i32
    return %arg1, %c0_i32, %c0_i32_0 : i32, i32, i32
  }
  func.func @transform_4(%arg0: i32, %arg1: i32, %arg2: i32) -> (i32, i32, i32, i32) {
    %c0_i32 = arith.constant 0 : i32
    %c0_i32_0 = arith.constant 0 : i32
    %c0_i32_1 = arith.constant 0 : i32
    %c0_i32_2 = arith.constant 0 : i32
    return %arg1, %c0_i32, %c0_i32_0, %c0_i32_1 : i32, i32, i32, i32
  }
  func.func @transform_5(%arg0: i32, %arg1: i32, %arg2: i32) -> (i32, i32, i32, i32) {
    %c0_i32 = arith.constant 0 : i32
    %c0_i32_0 = arith.constant 0 : i32
    %c0_i32_1 = arith.constant 0 : i32
    %c0_i32_2 = arith.constant 0 : i32
    return %arg1, %c0_i32, %c0_i32_0, %c0_i32_1 : i32, i32, i32, i32
  }
  func.func @transform_6(%arg0: i32, %arg1: i32, %arg2: i32) -> (i32, i32, i32, i32) {
    %c0_i32 = arith.constant 0 : i32
    %c0_i32_0 = arith.constant 0 : i32
    %c0_i32_1 = arith.constant 0 : i32
    %c0_i32_2 = arith.constant 0 : i32
    return %arg1, %c0_i32, %c0_i32_0, %c0_i32_1 : i32, i32, i32, i32
  }
  func.func @transform_7(%arg0: i32, %arg1: i32, %arg2: i32) -> (i32, i32, i32, i32) {
    %c0_i32 = arith.constant 0 : i32
    %c0_i32_0 = arith.constant 0 : i32
    %c0_i32_1 = arith.constant 0 : i32
    %c0_i32_2 = arith.constant 0 : i32
    return %arg1, %c0_i32, %c0_i32_0, %c0_i32_1 : i32, i32, i32, i32
  }
  func.func @transform_8(%arg0: i32, %arg1: i32, %arg2: i32) -> (i32, i32, i32) {
    %c0_i32 = arith.constant 0 : i32
    %c0_i32_0 = arith.constant 0 : i32
    return %arg1, %c0_i32, %arg2 : i32, i32, i32
  }
  func.func @transform_9(%arg0: i32, %arg1: i32, %arg2: i32) -> (i32, i32, i32) {
    %c0_i32 = arith.constant 0 : i32
    %c0_i32_0 = arith.constant 0 : i32
    return %arg1, %c0_i32, %arg2 : i32, i32, i32
  }
  func.func @transform_10(%arg0: i32, %arg1: i32, %arg2: i32) -> (i32, i32, i32) {
    %c0_i32 = arith.constant 0 : i32
    %c0_i32_0 = arith.constant 0 : i32
    return %arg1, %arg2, %c0_i32 : i32, i32, i32
  }
  func.func @transform_11(%arg0: i32, %arg1: i32, %arg2: i32) -> (i32, i32, i32) {
    %c0_i32 = arith.constant 0 : i32
    %c0_i32_0 = arith.constant 0 : i32
    %c0_i32_1 = arith.constant 0 : i32
    return %arg1, %c0_i32, %c0_i32_0 : i32, i32, i32
  }
  func.func @transform_12(%arg0: i32, %arg1: i32, %arg2: i32) -> (i32, i32, i32) {
    %c0_i32 = arith.constant 0 : i32
    %c0_i32_0 = arith.constant 0 : i32
    %c0_i32_1 = arith.constant 0 : i32
    return %arg1, %c0_i32, %c0_i32_0 : i32, i32, i32
  }
  func.func @transform_13(%arg0: i32, %arg1: i32, %arg2: i32) -> (i32, i32, i32) {
    %c0_i32 = arith.constant 0 : i32
    %c0_i32_0 = arith.constant 0 : i32
    %c0_i32_1 = arith.constant 0 : i32
    return %arg1, %c0_i32, %c0_i32_0 : i32, i32, i32
  }
  func.func @transform_14(%arg0: i32, %arg1: i32, %arg2: i32) -> (i32, i32) {
    %c0_i32 = arith.constant 0 : i32
    %c0_i32_0 = arith.constant 0 : i32
    return %arg0, %c0_i32 : i32, i32
  }
}

</mosaic_0001>

<llo_original>
// kernel: encoder_forward.1
$region0: #{encoder_forward.1}
  #allocation0 [shape = 'u32[]', space=smem, size = 0x4, offset = 0x4, fixed_abs, tag = 'smem constant byte address 0x4 - core index']
  #allocation1 [shape = 'u32[144,128]{1,0:T(1,128)}', space=vmem, size = 0x12000, scoped, tag = 'internal scratch']
  #allocation2 [shape = 'bf16[8,32]{1,0:T(8,128)(2,1)}', space=vmem, size = 0x800, scoped, tag = 'scratch operand']
  #allocation3 [shape = 'f32[8,32]{1,0:T(8,128)}', space=vmem, size = 0x1000, scoped, tag = 'scratch operand']
  #allocation4 [shape = 'f32[8,32]{1,0:T(8,128)}', space=vmem, size = 0x1000, scoped, tag = 'scratch operand']
  %s0 = inlined_call_operand.vmem [shape: f32[16,32], index: 0, kind: input, shape index: {}, may-alias: {0,14}]
  %s1 = inlined_call_operand.vmem [shape: f32[2,8,32], index: 1, kind: input, shape index: {}]
  %s2 = inlined_call_operand.vmem [shape: f32[2,1,32], index: 2, kind: input, shape index: {}]
  %s3 = inlined_call_operand.vmem [shape: f32[2,1,32], index: 3, kind: input, shape index: {}]
  %s4 = inlined_call_operand.vmem [shape: bf16[2,4,32,8], index: 4, kind: input, shape index: {}]
  %s5 = inlined_call_operand.vmem [shape: bf16[2,4,32,8], index: 5, kind: input, shape index: {}]
  %s6 = inlined_call_operand.vmem [shape: bf16[2,4,32,8], index: 6, kind: input, shape index: {}]
  %s7 = inlined_call_operand.vmem [shape: bf16[2,4,8,32], index: 7, kind: input, shape index: {}]
  %s8 = inlined_call_operand.vmem [shape: bf16[2,32,64], index: 8, kind: input, shape index: {}]
  %s9 = inlined_call_operand.vmem [shape: f32[2,1,64], index: 9, kind: input, shape index: {}]
  %s10 = inlined_call_operand.vmem [shape: bf16[2,64,32], index: 10, kind: input, shape index: {}]
  %s11 = inlined_call_operand.vmem [shape: f32[2,1,32], index: 11, kind: input, shape index: {}]
  %s12 = inlined_call_operand.vmem [shape: f32[2,1,32], index: 12, kind: input, shape index: {}]
  %s13 = inlined_call_operand.vmem [shape: f32[2,1,32], index: 13, kind: input, shape index: {}]
  %s14 = inlined_call_operand.vmem [shape: f32[16,32], index: 14, kind: output, shape index: {}, may-alias: {0,14}]
  %s15 = sld [smem:[#allocation0]]
  $region101: #{encoder_forward.1} parent=0
    _
  %s17 = ssub.s32 1, %s15
  %s18 = scalar_select 0, %s17, %s15
  loop: start=0, step=1, limit=6
  $region2: #{encoder_forward.1} parent=0 // loop_pre_header
    _
  $region3: #{encoder_forward.1} parent=0 // loop_header
    %s20 = sphi 0, %s24
    %p21 = scmp.ge.s32.totalorder %s20, 6
    %s27 = sphi 0, %s46
    %s28 = sphi 0, %s42
    %s29 = sphi 0, %s38
    %s30 = sphi 0, %s27
    %s31 = sphi 0, %s28
    %s32 = sphi 0, %s29
    %s33 = sphi 0, %s30
    %s34 = sphi 0, %s31
    %s35 = sphi 0, %s32
    %s49 = sphi 0, %s51
    %s52 = sphi 0, %s49
    %s53 = sphi 0, %s52
    %s69 = sphi 0, %s53
    %s75 = sphi 0, %s77
    %s78 = sphi 0, %s75
    %s79 = sphi 0, %s78
    %s95 = sphi 0, %s79
    %s101 = sphi 0, %s103
    %s104 = sphi 0, %s101
    %s105 = sphi 0, %s104
    %s121 = sphi 0, %s105
    %s127 = sphi 0, %s129
    %s130 = sphi 0, %s127
    %s131 = sphi 0, %s130
    %s147 = sphi 0, %s131
    %s153 = sphi 0, %s155
    %s156 = sphi 0, %s153
    %s157 = sphi 0, %s156
    %s173 = sphi 0, %s157
    %s179 = sphi 0, %s181
    %s182 = sphi 0, %s179
    %s183 = sphi 0, %s182
    %s199 = sphi 0, %s183
    %s205 = sphi 0, %s207
    %s208 = sphi 0, %s205
    %s209 = sphi 0, %s208
    %s225 = sphi 0, %s209
    %s231 = sphi 0, %s233
    %s234 = sphi 0, %s231
    %s235 = sphi 0, %s234
    %s251 = sphi 0, %s235
    %s259 = sphi 0, %s261
    %s262 = sphi 0, %s259
    %s263 = sphi 0, %s262
    %s279 = sphi 0, %s263
    %s287 = sphi 0, %s289
    %s290 = sphi 0, %s287
    %s291 = sphi 0, %s290
    %s307 = sphi 0, %s291
    %s315 = sphi 0, %s317
    %s318 = sphi 0, %s315
    %s319 = sphi 0, %s318
    %s335 = sphi 0, %s319
    %s341 = sphi 0, %s343
    %s344 = sphi 0, %s341
    %s345 = sphi 0, %s344
    %s361 = sphi 0, %s345
    %s367 = sphi 0, %s369
    %s370 = sphi 0, %s367
    %s371 = sphi 0, %s370
    %s387 = sphi 0, %s371
    %s393 = sphi 0, %s395
    %s396 = sphi 0, %s393
    %s397 = sphi 0, %s396
    %s413 = sphi 0, %s397
    %s419 = sphi 0, %s421
    %s422 = sphi 0, %s419
    %s423 = sphi 0, %s422
    %s439 = sphi 0, %s423
  $region4: #{encoder_forward.1} parent=0 // loop_header_branch
    %23 = sbr.rel (%p21) target = $region8
  $region5: #{encoder_forward.1} parent=0 // loop_body
    %s25 = ssub.s32 %s20, 1
    %s26 = ssub.s32 %s20, 2
    %s36 = sadd.s32 1, %s29
    %p37 = scmp.ge.s32.totalorder %s36, 1
    %s38 = scalar_select %p37, 0, %s36
    %s39 = sadd.s32 1, %s28
    %s40 = scalar_select %p37, %s39, %s28
    %p41 = scmp.ge.s32.totalorder %s40, 2
    %s42 = scalar_select %p41, 0, %s40
    %s43 = sadd.s32 1, %s27
    %s44 = scalar_select %p41, %s43, %s27
    %p45 = scmp.ge.s32.totalorder %s44, 2
    %s46 = scalar_select %p45, 0, %s44
    %s47 = ssub.s32 %s27, %s46
    %p48 = scmp.eq.s32.totalorder %s47, 0
    %s50 = sadd.s32 %s49, 1
    %s51 = scalar_select %p48, %s49, %s50
    %p54 = pneg %p48
    %p55 = scmp.eq.s32.totalorder %s20, 3
    %p56 = por %p54, %p55
    %p57 = scmp.ne.s32.totalorder %s49, %s52
    %p58 = scmp.eq.s32.totalorder %s20, 0
    %p59 = por %p57, %p58
    %p60 = scmp.ne.s32.totalorder %s49, %s52
    %p61 = scmp.eq.s32.totalorder %s25, 3
    %p62 = por %p60, %p61
    %p63 = scmp.ne.s32.totalorder %s52, %s53
    %p64 = scmp.eq.s32.totalorder %s25, 0
    %p65 = por %p63, %p64
    %p66 = scmp.ne.s32.totalorder %s52, %s53
    %p67 = scmp.eq.s32.totalorder %s26, 3
    %p68 = por %p66, %p67
    %p70 = scmp.ne.s32.totalorder %s53, %s69
    %p71 = scmp.eq.s32.totalorder %s26, 0
    %p72 = por %p70, %p71
    %s73 = ssub.s32 %s28, %s42
    %p74 = scmp.eq.s32.totalorder %s73, 0
    %s76 = sadd.s32 %s75, 1
    %s77 = scalar_select %p74, %s75, %s76
    %p80 = pneg %p74
    %p81 = scmp.eq.s32.totalorder %s20, 3
    %p82 = por %p80, %p81
    %p83 = scmp.ne.s32.totalorder %s75, %s78
    %p84 = scmp.eq.s32.totalorder %s20, 0
    %p85 = por %p83, %p84
    %p86 = scmp.ne.s32.totalorder %s75, %s78
    %p87 = scmp.eq.s32.totalorder %s25, 3
    %p88 = por %p86, %p87
    %p89 = scmp.ne.s32.totalorder %s78, %s79
    %p90 = scmp.eq.s32.totalorder %s25, 0
    %p91 = por %p89, %p90
    %p92 = scmp.ne.s32.totalorder %s78, %s79
    %p93 = scmp.eq.s32.totalorder %s26, 3
    %p94 = por %p92, %p93
    %p96 = scmp.ne.s32.totalorder %s79, %s95
    %p97 = scmp.eq.s32.totalorder %s26, 0
    %p98 = por %p96, %p97
    %s99 = ssub.s32 %s28, %s42
    %p100 = scmp.eq.s32.totalorder %s99, 0
    %s102 = sadd.s32 %s101, 1
    %s103 = scalar_select %p100, %s101, %s102
    %p106 = pneg %p100
    %p107 = scmp.eq.s32.totalorder %s20, 3
    %p108 = por %p106, %p107
    %p109 = scmp.ne.s32.totalorder %s101, %s104
    %p110 = scmp.eq.s32.totalorder %s20, 0
    %p111 = por %p109, %p110
    %p112 = scmp.ne.s32.totalorder %s101, %s104
    %p113 = scmp.eq.s32.totalorder %s25, 3
    %p114 = por %p112, %p113
    %p115 = scmp.ne.s32.totalorder %s104, %s105
    %p116 = scmp.eq.s32.totalorder %s25, 0
    %p117 = por %p115, %p116
    %p118 = scmp.ne.s32.totalorder %s104, %s105
    %p119 = scmp.eq.s32.totalorder %s26, 3
    %p120 = por %p118, %p119
    %p122 = scmp.ne.s32.totalorder %s105, %s121
    %p123 = scmp.eq.s32.totalorder %s26, 0
    %p124 = por %p122, %p123
    %s125 = ssub.s32 %s28, %s42
    %p126 = scmp.eq.s32.totalorder %s125, 0
    %s128 = sadd.s32 %s127, 1
    %s129 = scalar_select %p126, %s127, %s128
    %p132 = pneg %p126
    %p133 = scmp.eq.s32.totalorder %s20, 3
    %p134 = por %p132, %p133
    %p135 = scmp.ne.s32.totalorder %s127, %s130
    %p136 = scmp.eq.s32.totalorder %s20, 0
    %p137 = por %p135, %p136
    %p138 = scmp.ne.s32.totalorder %s127, %s130
    %p139 = scmp.eq.s32.totalorder %s25, 3
    %p140 = por %p138, %p139
    %p141 = scmp.ne.s32.totalorder %s130, %s131
    %p142 = scmp.eq.s32.totalorder %s25, 0
    %p143 = por %p141, %p142
    %p144 = scmp.ne.s32.totalorder %s130, %s131
    %p145 = scmp.eq.s32.totalorder %s26, 3
    %p146 = por %p144, %p145
    %p148 = scmp.ne.s32.totalorder %s131, %s147
    %p149 = scmp.eq.s32.totalorder %s26, 0
    %p150 = por %p148, %p149
    %s151 = ssub.s32 %s28, %s42
    %p152 = scmp.eq.s32.totalorder %s151, 0
    %s154 = sadd.s32 %s153, 1
    %s155 = scalar_select %p152, %s153, %s154
    %p158 = pneg %p152
    %p159 = scmp.eq.s32.totalorder %s20, 3
    %p160 = por %p158, %p159
    %p161 = scmp.ne.s32.totalorder %s153, %s156
    %p162 = scmp.eq.s32.totalorder %s20, 0
    %p163 = por %p161, %p162
    %p164 = scmp.ne.s32.totalorder %s153, %s156
    %p165 = scmp.eq.s32.totalorder %s25, 3
    %p166 = por %p164, %p165
    %p167 = scmp.ne.s32.totalorder %s156, %s157
    %p168 = scmp.eq.s32.totalorder %s25, 0
    %p169 = por %p167, %p168
    %p170 = scmp.ne.s32.totalorder %s156, %s157
    %p171 = scmp.eq.s32.totalorder %s26, 3
    %p172 = por %p170, %p171
    %p174 = scmp.ne.s32.totalorder %s157, %s173
    %p175 = scmp.eq.s32.totalorder %s26, 0
    %p176 = por %p174, %p175
    %s177 = ssub.s32 %s28, %s42
    %p178 = scmp.eq.s32.totalorder %s177, 0
    %s180 = sadd.s32 %s179, 1
    %s181 = scalar_select %p178, %s179, %s180
    %p184 = pneg %p178
    %p185 = scmp.eq.s32.totalorder %s20, 3
    %p186 = por %p184, %p185
    %p187 = scmp.ne.s32.totalorder %s179, %s182
    %p188 = scmp.eq.s32.totalorder %s20, 0
    %p189 = por %p187, %p188
    %p190 = scmp.ne.s32.totalorder %s179, %s182
    %p191 = scmp.eq.s32.totalorder %s25, 3
    %p192 = por %p190, %p191
    %p193 = scmp.ne.s32.totalorder %s182, %s183
    %p194 = scmp.eq.s32.totalorder %s25, 0
    %p195 = por %p193, %p194
    %p196 = scmp.ne.s32.totalorder %s182, %s183
    %p197 = scmp.eq.s32.totalorder %s26, 3
    %p198 = por %p196, %p197
    %p200 = scmp.ne.s32.totalorder %s183, %s199
    %p201 = scmp.eq.s32.totalorder %s26, 0
    %p202 = por %p200, %p201
    %s203 = ssub.s32 %s28, %s42
    %p204 = scmp.eq.s32.totalorder %s203, 0
    %s206 = sadd.s32 %s205, 1
    %s207 = scalar_select %p204, %s205, %s206
    %p210 = pneg %p204
    %p211 = scmp.eq.s32.totalorder %s20, 3
    %p212 = por %p210, %p211
    %p213 = scmp.ne.s32.totalorder %s205, %s208
    %p214 = scmp.eq.s32.totalorder %s20, 0
    %p215 = por %p213, %p214
    %p216 = scmp.ne.s32.totalorder %s205, %s208
    %p217 = scmp.eq.s32.totalorder %s25, 3
    %p218 = por %p216, %p217
    %p219 = scmp.ne.s32.totalorder %s208, %s209
    %p220 = scmp.eq.s32.totalorder %s25, 0
    %p221 = por %p219, %p220
    %p222 = scmp.ne.s32.totalorder %s208, %s209
    %p223 = scmp.eq.s32.totalorder %s26, 3
    %p224 = por %p222, %p223
    %p226 = scmp.ne.s32.totalorder %s209, %s225
    %p227 = scmp.eq.s32.totalorder %s26, 0
    %p228 = por %p226, %p227
    %s229 = ssub.s32 %s28, %s42
    %p230 = scmp.eq.s32.totalorder %s229, 0
    %s232 = sadd.s32 %s231, 1
    %s233 = scalar_select %p230, %s231, %s232
    %p236 = pneg %p230
    %p237 = scmp.eq.s32.totalorder %s20, 3
    %p238 = por %p236, %p237
    %p239 = scmp.ne.s32.totalorder %s231, %s234
    %p240 = scmp.eq.s32.totalorder %s20, 0
    %p241 = por %p239, %p240
    %p242 = scmp.ne.s32.totalorder %s231, %s234
    %p243 = scmp.eq.s32.totalorder %s25, 3
    %p244 = por %p242, %p243
    %p245 = scmp.ne.s32.totalorder %s234, %s235
    %p246 = scmp.eq.s32.totalorder %s25, 0
    %p247 = por %p245, %p246
    %p248 = scmp.ne.s32.totalorder %s234, %s235
    %p249 = scmp.eq.s32.totalorder %s26, 3
    %p250 = por %p248, %p249
    %p252 = scmp.ne.s32.totalorder %s235, %s251
    %p253 = scmp.eq.s32.totalorder %s26, 0
    %p254 = por %p252, %p253
    %s255 = ssub.s32 %s28, %s42
    %s256 = ssub.s32 %s29, %s38
    %s257 = sor.u32 %s255, %s256
    %p258 = scmp.eq.s32.totalorder %s257, 0
    %s260 = sadd.s32 %s259, 1
    %s261 = scalar_select %p258, %s259, %s260
    %p264 = pneg %p258
    %p265 = scmp.eq.s32.totalorder %s20, 3
    %p266 = por %p264, %p265
    %p267 = scmp.ne.s32.totalorder %s259, %s262
    %p268 = scmp.eq.s32.totalorder %s20, 0
    %p269 = por %p267, %p268
    %p270 = scmp.ne.s32.totalorder %s259, %s262
    %p271 = scmp.eq.s32.totalorder %s25, 3
    %p272 = por %p270, %p271
    %p273 = scmp.ne.s32.totalorder %s262, %s263
    %p274 = scmp.eq.s32.totalorder %s25, 0
    %p275 = por %p273, %p274
    %p276 = scmp.ne.s32.totalorder %s262, %s263
    %p277 = scmp.eq.s32.totalorder %s26, 3
    %p278 = por %p276, %p277
    %p280 = scmp.ne.s32.totalorder %s263, %s279
    %p281 = scmp.eq.s32.totalorder %s26, 0
    %p282 = por %p280, %p281
    %s283 = ssub.s32 %s28, %s42
    %s284 = ssub.s32 %s29, %s38
    %s285 = sor.u32 %s283, %s284
    %p286 = scmp.eq.s32.totalorder %s285, 0
    %s288 = sadd.s32 %s287, 1
    %s289 = scalar_select %p286, %s287, %s288
    %p292 = pneg %p286
    %p293 = scmp.eq.s32.totalorder %s20, 3
    %p294 = por %p292, %p293
    %p295 = scmp.ne.s32.totalorder %s287, %s290
    %p296 = scmp.eq.s32.totalorder %s20, 0
    %p297 = por %p295, %p296
    %p298 = scmp.ne.s32.totalorder %s287, %s290
    %p299 = scmp.eq.s32.totalorder %s25, 3
    %p300 = por %p298, %p299
    %p301 = scmp.ne.s32.totalorder %s290, %s291
    %p302 = scmp.eq.s32.totalorder %s25, 0
    %p303 = por %p301, %p302
    %p304 = scmp.ne.s32.totalorder %s290, %s291
    %p305 = scmp.eq.s32.totalorder %s26, 3
    %p306 = por %p304, %p305
    %p308 = scmp.ne.s32.totalorder %s291, %s307
    %p309 = scmp.eq.s32.totalorder %s26, 0
    %p310 = por %p308, %p309
    %s311 = ssub.s32 %s28, %s42
    %s312 = ssub.s32 %s29, %s38
    %s313 = sor.u32 %s311, %s312
    %p314 = scmp.eq.s32.totalorder %s313, 0
    %s316 = sadd.s32 %s315, 1
    %s317 = scalar_select %p314, %s315, %s316
    %p320 = pneg %p314
    %p321 = scmp.eq.s32.totalorder %s20, 3
    %p322 = por %p320, %p321
    %p323 = scmp.ne.s32.totalorder %s315, %s318
    %p324 = scmp.eq.s32.totalorder %s20, 0
    %p325 = por %p323, %p324
    %p326 = scmp.ne.s32.totalorder %s315, %s318
    %p327 = scmp.eq.s32.totalorder %s25, 3
    %p328 = por %p326, %p327
    %p329 = scmp.ne.s32.totalorder %s318, %s319
    %p330 = scmp.eq.s32.totalorder %s25, 0
    %p331 = por %p329, %p330
    %p332 = scmp.ne.s32.totalorder %s318, %s319
    %p333 = scmp.eq.s32.totalorder %s26, 3
    %p334 = por %p332, %p333
    %p336 = scmp.ne.s32.totalorder %s319, %s335
    %p337 = scmp.eq.s32.totalorder %s26, 0
    %p338 = por %p336, %p337
    %s339 = ssub.s32 %s28, %s42
    %p340 = scmp.eq.s32.totalorder %s339, 0
    %s342 = sadd.s32 %s341, 1
    %s343 = scalar_select %p340, %s341, %s342
    %p346 = pneg %p340
    %p347 = scmp.eq.s32.totalorder %s20, 3
    %p348 = por %p346, %p347
    %p349 = scmp.ne.s32.totalorder %s341, %s344
    %p350 = scmp.eq.s32.totalorder %s20, 0
    %p351 = por %p349, %p350
    %p352 = scmp.ne.s32.totalorder %s341, %s344
    %p353 = scmp.eq.s32.totalorder %s25, 3
    %p354 = por %p352, %p353
    %p355 = scmp.ne.s32.totalorder %s344, %s345
    %p356 = scmp.eq.s32.totalorder %s25, 0
    %p357 = por %p355, %p356
    %p358 = scmp.ne.s32.totalorder %s344, %s345
    %p359 = scmp.eq.s32.totalorder %s26, 3
    %p360 = por %p358, %p359
    %p362 = scmp.ne.s32.totalorder %s345, %s361
    %p363 = scmp.eq.s32.totalorder %s26, 0
    %p364 = por %p362, %p363
    %s365 = ssub.s32 %s28, %s42
    %p366 = scmp.eq.s32.totalorder %s365, 0
    %s368 = sadd.s32 %s367, 1
    %s369 = scalar_select %p366, %s367, %s368
    %p372 = pneg %p366
    %p373 = scmp.eq.s32.totalorder %s20, 3
    %p374 = por %p372, %p373
    %p375 = scmp.ne.s32.totalorder %s367, %s370
    %p376 = scmp.eq.s32.totalorder %s20, 0
    %p377 = por %p375, %p376
    %p378 = scmp.ne.s32.totalorder %s367, %s370
    %p379 = scmp.eq.s32.totalorder %s25, 3
    %p380 = por %p378, %p379
    %p381 = scmp.ne.s32.totalorder %s370, %s371
    %p382 = scmp.eq.s32.totalorder %s25, 0
    %p383 = por %p381, %p382
    %p384 = scmp.ne.s32.totalorder %s370, %s371
    %p385 = scmp.eq.s32.totalorder %s26, 3
    %p386 = por %p384, %p385
    %p388 = scmp.ne.s32.totalorder %s371, %s387
    %p389 = scmp.eq.s32.totalorder %s26, 0
    %p390 = por %p388, %p389
    %s391 = ssub.s32 %s28, %s42
    %p392 = scmp.eq.s32.totalorder %s391, 0
    %s394 = sadd.s32 %s393, 1
    %s395 = scalar_select %p392, %s393, %s394
    %p398 = pneg %p392
    %p399 = scmp.eq.s32.totalorder %s20, 3
    %p400 = por %p398, %p399
    %p401 = scmp.ne.s32.totalorder %s393, %s396
    %p402 = scmp.eq.s32.totalorder %s20, 0
    %p403 = por %p401, %p402
    %p404 = scmp.ne.s32.totalorder %s393, %s396
    %p405 = scmp.eq.s32.totalorder %s25, 3
    %p406 = por %p404, %p405
    %p407 = scmp.ne.s32.totalorder %s396, %s397
    %p408 = scmp.eq.s32.totalorder %s25, 0
    %p409 = por %p407, %p408
    %p410 = scmp.ne.s32.totalorder %s396, %s397
    %p411 = scmp.eq.s32.totalorder %s26, 3
    %p412 = por %p410, %p411
    %p414 = scmp.ne.s32.totalorder %s397, %s413
    %p415 = scmp.eq.s32.totalorder %s26, 0
    %p416 = por %p414, %p415
    %s417 = ssub.s32 %s27, %s46
    %p418 = scmp.eq.s32.totalorder %s417, 0
    %s420 = sadd.s32 %s419, 1
    %s421 = scalar_select %p418, %s419, %s420
    %p424 = pneg %p418
    %p425 = scmp.eq.s32.totalorder %s20, 3
    %p426 = por %p424, %p425
    %p427 = scmp.ne.s32.totalorder %s419, %s422
    %p428 = scmp.eq.s32.totalorder %s20, 0
    %p429 = por %p427, %p428
    %p430 = scmp.ne.s32.totalorder %s419, %s422
    %p431 = scmp.eq.s32.totalorder %s25, 3
    %p432 = por %p430, %p431
    %p433 = scmp.ne.s32.totalorder %s422, %s423
    %p434 = scmp.eq.s32.totalorder %s25, 0
    %p435 = por %p433, %p434
    %p436 = scmp.ne.s32.totalorder %s422, %s423
    %p437 = scmp.eq.s32.totalorder %s26, 3
    %p438 = por %p436, %p437
    %p440 = scmp.ne.s32.totalorder %s423, %s439
    %p441 = scmp.eq.s32.totalorder %s26, 0
    %p442 = por %p440, %p441
    %p443 = scmp.le.s32.totalorder 1, %s20
    %p444 = scmp.lt.s32.totalorder %s20, 5
    %p445 = pnand %p443, %p444
    %p446 = pneg %p445
    // Predicated region
    $region9: #{encoder_forward.1} parent=5 // pred_check
      _
    $region10: #{encoder_forward.1} parent=5 // pred_check_branch
      %448 = sbr.rel (%p445) target = $region12
    $region11: #{encoder_forward.1} parent=5 // pred_region
      %s449 = ssub.s32 %s20, 1
    $region12: #{encoder_forward.1} parent=5 // pred_fallthru
      _
    %p450 = scmp.lt.s32.totalorder %s20, 4
    // Predicated region
    $region13: #{encoder_forward.1} parent=5 // pred_check
      %p451 = pneg %p450
    $region14: #{encoder_forward.1} parent=5 // pred_check_branch
      %453 = sbr.rel (%p451) target = $region16
    $region15: #{encoder_forward.1} parent=5 // pred_region
      // Predicated region
      $region17: #{encoder_forward.1} parent=15 // pred_check
        %p454 = pneg %p59
      $region18: #{encoder_forward.1} parent=15 // pred_check_branch
        %456 = sbr.rel (%p454) target = $region20
      $region19: #{encoder_forward.1} parent=15 // pred_region
        %p457 = scmp.lt.s32.totalorder %s27, 1
        %s458 = scalar_select %p457, %s27, 1
        %s459 = smul.addr %s458, 8
        %s460 = scalar_lea.vmem %s0, %s459
      $region20: #{encoder_forward.1} parent=15 // pred_fallthru
        _
      // Predicated region
      $region21: #{encoder_forward.1} parent=15 // pred_check
        %p461 = pneg %p85
      $region22: #{encoder_forward.1} parent=15 // pred_check_branch
        %463 = sbr.rel (%p461) target = $region24
      $region23: #{encoder_forward.1} parent=15 // pred_region
        %p464 = scmp.lt.s32.totalorder %s28, 1
        %s465 = scalar_select %p464, %s28, 1
        %s466 = smul.addr %s465, 8
        %s467 = scalar_lea.vmem %s1, %s466
      $region24: #{encoder_forward.1} parent=15 // pred_fallthru
        _
      // Predicated region
      $region25: #{encoder_forward.1} parent=15 // pred_check
        %p468 = pneg %p111
      $region26: #{encoder_forward.1} parent=15 // pred_check_branch
        %470 = sbr.rel (%p468) target = $region28
      $region27: #{encoder_forward.1} parent=15 // pred_region
        %p471 = scmp.lt.s32.totalorder %s28, 1
        %s472 = scalar_select %p471, %s28, 1
        %s473 = scalar_lea.vmem %s2, %s472
      $region28: #{encoder_forward.1} parent=15 // pred_fallthru
        _
      // Predicated region
      $region29: #{encoder_forward.1} parent=15 // pred_check
        %p474 = pneg %p137
      $region30: #{encoder_forward.1} parent=15 // pred_check_branch
        %476 = sbr.rel (%p474) target = $region32
      $region31: #{encoder_forward.1} parent=15 // pred_region
        %p477 = scmp.lt.s32.totalorder %s28, 1
        %s478 = scalar_select %p477, %s28, 1
        %s479 = scalar_lea.vmem %s3, %s478
      $region32: #{encoder_forward.1} parent=15 // pred_fallthru
        _
      // Predicated region
      $region33: #{encoder_forward.1} parent=15 // pred_check
        %p480 = pneg %p163
      $region34: #{encoder_forward.1} parent=15 // pred_check_branch
        %482 = sbr.rel (%p480) target = $region36
      $region35: #{encoder_forward.1} parent=15 // pred_region
        %p483 = scmp.lt.s32.totalorder %s28, 1
        %s484 = scalar_select %p483, %s28, 1
        %s485 = smul.addr %s484, 16
        %s486 = smul.addr %s485, 4
        %s487 = scalar_lea.vmem %s4, %s486
      $region36: #{encoder_forward.1} parent=15 // pred_fallthru
        _
      // Predicated region
      $region37: #{encoder_forward.1} parent=15 // pred_check
        %p488 = pneg %p189
      $region38: #{encoder_forward.1} parent=15 // pred_check_branch
        %490 = sbr.rel (%p488) target = $region40
      $region39: #{encoder_forward.1} parent=15 // pred_region
        %p491 = scmp.lt.s32.totalorder %s28, 1
        %s492 = scalar_select %p491, %s28, 1
        %s493 = smul.addr %s492, 16
        %s494 = smul.addr %s493, 4
        %s495 = scalar_lea.vmem %s5, %s494
      $region40: #{encoder_forward.1} parent=15 // pred_fallthru
        _
      // Predicated region
      $region41: #{encoder_forward.1} parent=15 // pred_check
        %p496 = pneg %p215
      $region42: #{encoder_forward.1} parent=15 // pred_check_branch
        %498 = sbr.rel (%p496) target = $region44
      $region43: #{encoder_forward.1} parent=15 // pred_region
        %p499 = scmp.lt.s32.totalorder %s28, 1
        %s500 = scalar_select %p499, %s28, 1
        %s501 = smul.addr %s500, 16
        %s502 = smul.addr %s501, 4
        %s503 = scalar_lea.vmem %s6, %s502
      $region44: #{encoder_forward.1} parent=15 // pred_fallthru
        _
      // Predicated region
      $region45: #{encoder_forward.1} parent=15 // pred_check
        %p504 = pneg %p241
      $region46: #{encoder_forward.1} parent=15 // pred_check_branch
        %506 = sbr.rel (%p504) target = $region48
      $region47: #{encoder_forward.1} parent=15 // pred_region
        %p507 = scmp.lt.s32.totalorder %s28, 1
        %s508 = scalar_select %p507, %s28, 1
        %s509 = smul.addr %s508, 4
        %s510 = smul.addr %s509, 4
        %s511 = scalar_lea.vmem %s7, %s510
      $region48: #{encoder_forward.1} parent=15 // pred_fallthru
        _
      // Predicated region
      $region49: #{encoder_forward.1} parent=15 // pred_check
        %p512 = pneg %p269
      $region50: #{encoder_forward.1} parent=15 // pred_check_branch
        %514 = sbr.rel (%p512) target = $region52
      $region51: #{encoder_forward.1} parent=15 // pred_region
        %p515 = scmp.lt.s32.totalorder %s28, 1
        %s516 = scalar_select %p515, %s28, 1
        %p517 = scmp.lt.s32.totalorder %s29, 0
        %s518 = scalar_select %p517, %s29, 0
        %s519 = smul.addr %s516, 4
        %s520 = sadd.s32 %s518, %s519
        %s521 = smul.addr %s520, 4
        %s522 = scalar_lea.vmem %s8, %s521
      $region52: #{encoder_forward.1} parent=15 // pred_fallthru
        _
      // Predicated region
      $region53: #{encoder_forward.1} parent=15 // pred_check
        %p523 = pneg %p297
      $region54: #{encoder_forward.1} parent=15 // pred_check_branch
        %525 = sbr.rel (%p523) target = $region56
      $region55: #{encoder_forward.1} parent=15 // pred_region
        %p526 = scmp.lt.s32.totalorder %s28, 1
        %s527 = scalar_select %p526, %s28, 1
        %p528 = scmp.lt.s32.totalorder %s29, 0
        %s529 = scalar_select %p528, %s29, 0
        %s530 = sadd.s32 %s529, %s527
        %s531 = scalar_lea.vmem %s9, %s530
      $region56: #{encoder_forward.1} parent=15 // pred_fallthru
        _
      // Predicated region
      $region57: #{encoder_forward.1} parent=15 // pred_check
        %p532 = pneg %p325
      $region58: #{encoder_forward.1} parent=15 // pred_check_branch
        %534 = sbr.rel (%p532) target = $region60
      $region59: #{encoder_forward.1} parent=15 // pred_region
        %s535 = smul.u32 8, %s29
        %p536 = scmp.lt.s32.totalorder %s28, 1
        %s537 = scalar_select %p536, %s28, 1
        %p538 = scmp.lt.s32.totalorder %s535, 7
        %s539 = scalar_select %p538, %s535, 7
        %s540 = smul.addr %s537, 8
        %s541 = sadd.s32 %s539, %s540
        %s542 = smul.addr %s541, 4
        %s543 = scalar_lea.vmem %s10, %s542
        %s544 = smul.u32 8, %s29
      $region60: #{encoder_forward.1} parent=15 // pred_fallthru
        _
      // Predicated region
      $region61: #{encoder_forward.1} parent=15 // pred_check
        %p545 = pneg %p351
      $region62: #{encoder_forward.1} parent=15 // pred_check_branch
        %547 = sbr.rel (%p545) target = $region64
      $region63: #{encoder_forward.1} parent=15 // pred_region
        %p548 = scmp.lt.s32.totalorder %s28, 1
        %s549 = scalar_select %p548, %s28, 1
        %s550 = scalar_lea.vmem %s11, %s549
      $region64: #{encoder_forward.1} parent=15 // pred_fallthru
        _
      // Predicated region
      $region65: #{encoder_forward.1} parent=15 // pred_check
        %p551 = pneg %p377
      $region66: #{encoder_forward.1} parent=15 // pred_check_branch
        %553 = sbr.rel (%p551) target = $region68
      $region67: #{encoder_forward.1} parent=15 // pred_region
        %p554 = scmp.lt.s32.totalorder %s28, 1
        %s555 = scalar_select %p554, %s28, 1
        %s556 = scalar_lea.vmem %s12, %s555
      $region68: #{encoder_forward.1} parent=15 // pred_fallthru
        _
      // Predicated region
      $region69: #{encoder_forward.1} parent=15 // pred_check
        %p557 = pneg %p403
      $region70: #{encoder_forward.1} parent=15 // pred_check_branch
        %559 = sbr.rel (%p557) target = $region72
      $region71: #{encoder_forward.1} parent=15 // pred_region
        %p560 = scmp.lt.s32.totalorder %s28, 1
        %s561 = scalar_select %p560, %s28, 1
        %s562 = scalar_lea.vmem %s13, %s561
      $region72: #{encoder_forward.1} parent=15 // pred_fallthru
        _
    $region16: #{encoder_forward.1} parent=5 // pred_fallthru
      _
    %p563 = scmp.le.s32.totalorder 1, %s20
    %p564 = scmp.lt.s32.totalorder %s20, 5
    %p565 = pnand %p563, %p564
    %p566 = pneg %p565
    // Predicated region
    $region73: #{encoder_forward.1} parent=5 // pred_check
      _
    $region74: #{encoder_forward.1} parent=5 // pred_check_branch
      %568 = sbr.rel (%p565) target = $region76
    $region75: #{encoder_forward.1} parent=5 // pred_region
      %s569 = ssub.s32 %s20, 1
      %p570 = scmp.lt.s32.totalorder %s30, 1
      %s571 = scalar_select %p570, %s30, 1
      %s572 = smul.addr %s571, 8
      %s573 = scalar_lea.vmem %s0, %s572
      %p574 = pneg %p65
      %p575 = pneg %p62
      %p576 = scmp.lt.s32.totalorder %s31, 1
      %s577 = scalar_select %p576, %s31, 1
      %s578 = smul.addr %s577, 8
      %s579 = scalar_lea.vmem %s1, %s578
      %p580 = pneg %p91
      %p581 = pneg %p88
      %p582 = scmp.lt.s32.totalorder %s31, 1
      %s583 = scalar_select %p582, %s31, 1
      %s584 = scalar_lea.vmem %s2, %s583
      %p585 = pneg %p117
      %p586 = pneg %p114
      %p587 = scmp.lt.s32.totalorder %s31, 1
      %s588 = scalar_select %p587, %s31, 1
      %s589 = scalar_lea.vmem %s3, %s588
      %p590 = pneg %p143
      %p591 = pneg %p140
      %p592 = scmp.lt.s32.totalorder %s31, 1
      %s593 = scalar_select %p592, %s31, 1
      %s594 = smul.addr %s593, 16
      %s595 = smul.addr %s594, 4
      %s596 = scalar_lea.vmem %s4, %s595
      %p597 = pneg %p169
      %p598 = pneg %p166
      %p599 = scmp.lt.s32.totalorder %s31, 1
      %s600 = scalar_select %p599, %s31, 1
      %s601 = smul.addr %s600, 16
      %s602 = smul.addr %s601, 4
      %s603 = scalar_lea.vmem %s5, %s602
      %p604 = pneg %p195
      %p605 = pneg %p192
      %p606 = scmp.lt.s32.totalorder %s31, 1
      %s607 = scalar_select %p606, %s31, 1
      %s608 = smul.addr %s607, 16
      %s609 = smul.addr %s608, 4
      %s610 = scalar_lea.vmem %s6, %s609
      %p611 = pneg %p221
      %p612 = pneg %p218
      %p613 = scmp.lt.s32.totalorder %s31, 1
      %s614 = scalar_select %p613, %s31, 1
      %s615 = smul.addr %s614, 4
      %s616 = smul.addr %s615, 4
      %s617 = scalar_lea.vmem %s7, %s616
      %p618 = pneg %p247
      %p619 = pneg %p244
      %p620 = scmp.lt.s32.totalorder %s31, 1
      %s621 = scalar_select %p620, %s31, 1
      %p622 = scmp.lt.s32.totalorder %s32, 0
      %s623 = scalar_select %p622, %s32, 0
      %s624 = smul.addr %s621, 4
      %s625 = sadd.s32 %s623, %s624
      %s626 = smul.addr %s625, 4
      %s627 = scalar_lea.vmem %s8, %s626
      %p628 = pneg %p275
      %p629 = pneg %p272
      %p630 = scmp.lt.s32.totalorder %s31, 1
      %s631 = scalar_select %p630, %s31, 1
      %p632 = scmp.lt.s32.totalorder %s32, 0
      %s633 = scalar_select %p632, %s32, 0
      %s634 = sadd.s32 %s633, %s631
      %s635 = scalar_lea.vmem %s9, %s634
      %p636 = pneg %p303
      %p637 = pneg %p300
      %s638 = smul.u32 8, %s32
      %p639 = scmp.lt.s32.totalorder %s31, 1
      %s640 = scalar_select %p639, %s31, 1
      %p641 = scmp.lt.s32.totalorder %s638, 7
      %s642 = scalar_select %p641, %s638, 7
      %s643 = smul.addr %s640, 8
      %s644 = sadd.s32 %s642, %s643
      %s645 = smul.addr %s644, 4
      %s646 = scalar_lea.vmem %s10, %s645
      %p647 = pneg %p331
      %p648 = pneg %p328
      %p649 = scmp.lt.s32.totalorder %s31, 1
      %s650 = scalar_select %p649, %s31, 1
      %s651 = scalar_lea.vmem %s11, %s650
      %p652 = pneg %p357
      %p653 = pneg %p354
      %p654 = scmp.lt.s32.totalorder %s31, 1
      %s655 = scalar_select %p654, %s31, 1
      %s656 = scalar_lea.vmem %s12, %s655
      %p657 = pneg %p383
      %p658 = pneg %p380
      %p659 = scmp.lt.s32.totalorder %s31, 1
      %s660 = scalar_select %p659, %s31, 1
      %s661 = scalar_lea.vmem %s13, %s660
      %p662 = pneg %p409
      %p663 = pneg %p406
      %p664 = pneg %p435
      %p665 = pneg %p432
      %p666 = scmp.lt.s32.totalorder %s30, 1
      %s667 = scalar_select %p666, %s30, 1
      %s668 = smul.addr %s667, 8
      %s669 = scalar_lea.vmem %s14, %s668
      %p670 = scmp.lt.s32.totalorder %s30, 1
      %s671 = scalar_select %p670, %s30, 1
      %s672 = smul.addr %s671, 8
      %s673 = scalar_lea.vmem %s0, %s672
      %p674 = scmp.lt.s32.totalorder %s31, 1
      %s675 = scalar_select %p674, %s31, 1
      %s676 = smul.addr %s675, 8
      %s677 = scalar_lea.vmem %s1, %s676
      %p678 = scmp.lt.s32.totalorder %s31, 1
      %s679 = scalar_select %p678, %s31, 1
      %s680 = scalar_lea.vmem %s2, %s679
      %p681 = scmp.lt.s32.totalorder %s31, 1
      %s682 = scalar_select %p681, %s31, 1
      %s683 = scalar_lea.vmem %s3, %s682
      %p684 = scmp.lt.s32.totalorder %s31, 1
      %s685 = scalar_select %p684, %s31, 1
      %s686 = smul.addr %s685, 16
      %s687 = smul.addr %s686, 4
      %s688 = scalar_lea.vmem %s4, %s687
      %p689 = scmp.lt.s32.totalorder %s31, 1
      %s690 = scalar_select %p689, %s31, 1
      %s691 = smul.addr %s690, 16
      %s692 = smul.addr %s691, 4
      %s693 = scalar_lea.vmem %s5, %s692
      %p694 = scmp.lt.s32.totalorder %s31, 1
      %s695 = scalar_select %p694, %s31, 1
      %s696 = smul.addr %s695, 16
      %s697 = smul.addr %s696, 4
      %s698 = scalar_lea.vmem %s6, %s697
      %p699 = scmp.lt.s32.totalorder %s31, 1
      %s700 = scalar_select %p699, %s31, 1
      %s701 = smul.addr %s700, 4
      %s702 = smul.addr %s701, 4
      %s703 = scalar_lea.vmem %s7, %s702
      %p704 = scmp.lt.s32.totalorder %s31, 1
      %s705 = scalar_select %p704, %s31, 1
      %p706 = scmp.lt.s32.totalorder %s32, 0
      %s707 = scalar_select %p706, %s32, 0
      %s708 = smul.addr %s705, 4
      %s709 = sadd.s32 %s707, %s708
      %s710 = smul.addr %s709, 4
      %s711 = scalar_lea.vmem %s8, %s710
      %p712 = scmp.lt.s32.totalorder %s31, 1
      %s713 = scalar_select %p712, %s31, 1
      %p714 = scmp.lt.s32.totalorder %s32, 0
      %s715 = scalar_select %p714, %s32, 0
      %s716 = sadd.s32 %s715, %s713
      %s717 = scalar_lea.vmem %s9, %s716
      %s718 = smul.u32 8, %s32
      %p719 = scmp.lt.s32.totalorder %s31, 1
      %s720 = scalar_select %p719, %s31, 1
      %p721 = scmp.lt.s32.totalorder %s718, 7
      %s722 = scalar_select %p721, %s718, 7
      %s723 = smul.addr %s720, 8
      %s724 = sadd.s32 %s722, %s723
      %s725 = smul.addr %s724, 4
      %s726 = scalar_lea.vmem %s10, %s725
      %s727 = smul.u32 8, %s32
      %p728 = scmp.lt.s32.totalorder %s31, 1
      %s729 = scalar_select %p728, %s31, 1
      %s730 = scalar_lea.vmem %s11, %s729
      %p731 = scmp.lt.s32.totalorder %s31, 1
      %s732 = scalar_select %p731, %s31, 1
      %s733 = scalar_lea.vmem %s12, %s732
      %p734 = scmp.lt.s32.totalorder %s31, 1
      %s735 = scalar_select %p734, %s31, 1
      %s736 = scalar_lea.vmem %s13, %s735
      %p737 = scmp.lt.s32.totalorder %s30, 1
      %s738 = scalar_select %p737, %s30, 1
      %s739 = smul.addr %s738, 8
      %s740 = scalar_lea.vmem %s14, %s739
      %p742 = scmp.eq.s32.totalorder %s31, 0
      %p743 = scmp.eq.s32.totalorder %s32, 0
      %p744 = pnand %p742, %p743
      %p745 = pneg %p744
      // Predicated region
      $region77: #{encoder_forward.1} parent=75 // pred_check
        _
      $region78: #{encoder_forward.1} parent=75 // pred_check_branch
        %747 = sbr.rel (%p744) target = $region80
      $region79: #{encoder_forward.1} parent=75 // pred_region
        %v748 = vld [vmem:[%s673] sm:$0xff]
        %vm749 = vcmask 261120
        %750 = vst.msk [vmem:[%s740] sm:$0xff] %vm749, %v748
      $region80: #{encoder_forward.1} parent=75 // pred_fallthru
        _
      // Predicated region
      $region81: #{encoder_forward.1} parent=75 // pred_check
        %p751 = pneg %p743
      $region82: #{encoder_forward.1} parent=75 // pred_check_branch
        %753 = sbr.rel (%p751) target = $region84
      $region83: #{encoder_forward.1} parent=75 // pred_region
        %v754 = vld [vmem:[%s740] sm:$0xff]
        %v755 = vld [vmem:[%s677] sm:$0xff]
        %v756 = vadd.f32 %v754, %v755
        %vm757 = vcmask 261120
        %v758 = vsel %vm757, %v756, 0.0
        %759 = vadd.xlane.f32.xlu0 %v758
        %v760 = vpop.xlane.xlu0 %759
        %v761 = vrcp.pop 32.0
        %v762 = vmul.f32 %v760, %v761
        %v763 = vsub.f32 %v756, %v762
        %v764 = vmul.f32 %v763, %v763
        %v765 = vsel %vm757, %v764, 0.0
        %766 = vadd.xlane.f32.xlu0 %v765
        %v767 = vpop.xlane.xlu0 %766
        %v768 = vmul.f32 %v767, %v761
        %v769 = vadd.f32 %v768, 1e-06
        %v770 = vrsqrt.pop %v769
        %v771 = vmul.f32 %v763, %v770
        %v772 = vld [vmem:[%s680] sm:$0x1]
        %v774 = vlaneseq
        %v775 = vshrl.u32 %v774, 7
        %v776 = vsub.s32 0, %v775
        %v777 = vrot.slane %v772, %v776
        %v779 = vmul.f32 %v771, %v777
        %v780 = vld [vmem:[%s683] sm:$0x1]
        %v782 = vlaneseq
        %v783 = vshrl.u32 %v782, 7
        %v784 = vsub.s32 0, %v783
        %v785 = vrot.slane %v780, %v784
        %v787 = vadd.f32 %v779, %v785
        %v788 = vpack.c.bf16 %v787, %v787
        %vm789 = vcmask 257024
        %790 = vst.msk [vmem:[#allocation2] sm:$0xf] %vm789, %v788
        %v791 = vld [vmem:[%s688] sm:$0xf]
        %v792 = vld [vmem:[%s688 + $0x4] sm:$0xf]
        %v793 = vld [vmem:[%s688 + $0x8] sm:$0xf]
        %v794 = vld [vmem:[%s688 + $0xc] sm:$0xf]
        %v799 = vunpack.c.l.b16 %v791
        %v800 = vunpack.c.l.b16 %v792
        %v801 = vunpack.c.l.b16 %v793
        %v802 = vunpack.c.l.b16 %v794
        %v803 = vpack.c.b16 %v800, %v799
        %v804 = vpack.c.b16 %v802, %v801
        %v808 = vsel %vm757, %v788, 0
        %810 = vmatprep.subr.bf16.mxu0 0
        %811 = vmatpush1.bf16.msra.mxu0 %v803
        %812 = vmatprep.subr.bf16.mxu0 0
        %813 = vmatpush1.bf16.msra.mxu0 %v804
        %814 = vmatprep.subr.bf16.mxu0 0
        %815 = vmatpush1.bf16.msra.mxu0 0
        %816 = vmatprep.subr.bf16.mxu0 0
        %817 = vmatpush1.bf16.msra.mxu0 0
        %818 = vmatprep.subr.bf16.mxu0 0
        %819 = vmatpush1.bf16.msra.mxu0 0
        %820 = vmatprep.subr.bf16.mxu0 0
        %821 = vmatpush1.bf16.msra.mxu0 0
        %822 = vmatprep.subr.bf16.mxu0 0
        %823 = vmatpush1.bf16.msra.mxu0 0
        %824 = vmatprep.subr.bf16.mxu0 0
        %825 = vmatpush1.bf16.msra.mxu0 0
        %826 = vmatprep.subr.bf16.mxu0 0
        %827 = vmatpush1.bf16.msra.mxu0 0
        %828 = vmatprep.subr.bf16.mxu0 0
        %829 = vmatpush1.bf16.msra.mxu0 0
        %830 = vmatprep.subr.bf16.mxu0 0
        %831 = vmatpush1.bf16.msra.mxu0 0
        %832 = vmatprep.subr.bf16.mxu0 0
        %833 = vmatpush1.bf16.msra.mxu0 0
        %834 = vmatprep.subr.bf16.mxu0 0
        %835 = vmatpush1.bf16.msra.mxu0 0
        %836 = vmatprep.subr.bf16.mxu0 0
        %837 = vmatpush1.bf16.msra.mxu0 0
        %838 = vmatprep.subr.bf16.mxu0 0
        %839 = vmatpush1.bf16.msra.mxu0 0
        %840 = vmatprep.subr.bf16.mxu0 0
        %841 = vmatpush1.bf16.msra.mxu0 0
        %842 = vmatprep.mubr.bf16.mxu0 0
        %843 = vmatmul.mubr.bf16.gmra.mrb[0].mxu0 %v808
        %v844 = vpop.f32.mrb[0].mxu0
        %v845 = vadd.f32 0.0, %v844
        %v846 = vpop.f32.mrb[0].mxu0
        %v847 = vpop.f32.mrb[0].mxu0
        %v848 = vpop.f32.mrb[0].mxu0
        %849 = vdwg.mxu0
        %v850 = vld [vmem:[%s693] sm:$0xf]
        %v851 = vld [vmem:[%s693 + $0x4] sm:$0xf]
        %v852 = vld [vmem:[%s693 + $0x8] sm:$0xf]
        %v853 = vld [vmem:[%s693 + $0xc] sm:$0xf]
        %v858 = vunpack.c.l.b16 %v850
        %v859 = vunpack.c.l.b16 %v851
        %v860 = vunpack.c.l.b16 %v852
        %v861 = vunpack.c.l.b16 %v853
        %v862 = vpack.c.b16 %v859, %v858
        %v863 = vpack.c.b16 %v861, %v860
        %866 = vmatprep.subr.bf16.mxu0 0
        %867 = vmatpush1.bf16.msra.mxu0 %v862
        %868 = vmatprep.subr.bf16.mxu0 0
        %869 = vmatpush1.bf16.msra.mxu0 %v863
        %870 = vmatprep.subr.bf16.mxu0 0
        %871 = vmatpush1.bf16.msra.mxu0 0
        %872 = vmatprep.subr.bf16.mxu0 0
        %873 = vmatpush1.bf16.msra.mxu0 0
        %874 = vmatprep.subr.bf16.mxu0 0
        %875 = vmatpush1.bf16.msra.mxu0 0
        %876 = vmatprep.subr.bf16.mxu0 0
        %877 = vmatpush1.bf16.msra.mxu0 0
        %878 = vmatprep.subr.bf16.mxu0 0
        %879 = vmatpush1.bf16.msra.mxu0 0
        %880 = vmatprep.subr.bf16.mxu0 0
        %881 = vmatpush1.bf16.msra.mxu0 0
        %882 = vmatprep.subr.bf16.mxu0 0
        %883 = vmatpush1.bf16.msra.mxu0 0
        %884 = vmatprep.subr.bf16.mxu0 0
        %885 = vmatpush1.bf16.msra.mxu0 0
        %886 = vmatprep.subr.bf16.mxu0 0
        %887 = vmatpush1.bf16.msra.mxu0 0
        %888 = vmatprep.subr.bf16.mxu0 0
        %889 = vmatpush1.bf16.msra.mxu0 0
        %890 = vmatprep.subr.bf16.mxu0 0
        %891 = vmatpush1.bf16.msra.mxu0 0
        %892 = vmatprep.subr.bf16.mxu0 0
        %893 = vmatpush1.bf16.msra.mxu0 0
        %894 = vmatprep.subr.bf16.mxu0 0
        %895 = vmatpush1.bf16.msra.mxu0 0
        %896 = vmatprep.subr.bf16.mxu0 0
        %897 = vmatpush1.bf16.msra.mxu0 0
        %898 = vmatprep.mubr.bf16.mxu0 0
        %899 = vmatmul.mubr.bf16.gmra.mrb[0].mxu0 %v808
        %v900 = vpop.f32.mrb[0].mxu0
        %v901 = vadd.f32 0.0, %v900
        %v902 = vpop.f32.mrb[0].mxu0
        %v903 = vpop.f32.mrb[0].mxu0
        %v904 = vpop.f32.mrb[0].mxu0
        %905 = vdwg.mxu0
        %v906 = vld [vmem:[%s698] sm:$0xf]
        %v907 = vld [vmem:[%s698 + $0x4] sm:$0xf]
        %v908 = vld [vmem:[%s698 + $0x8] sm:$0xf]
        %v909 = vld [vmem:[%s698 + $0xc] sm:$0xf]
        %v914 = vunpack.c.l.b16 %v906
        %v915 = vunpack.c.l.b16 %v907
        %v916 = vunpack.c.l.b16 %v908
        %v917 = vunpack.c.l.b16 %v909
        %v918 = vpack.c.b16 %v915, %v914
        %v919 = vpack.c.b16 %v917, %v916
        %922 = vmatprep.subr.bf16.mxu0 0
        %923 = vmatpush1.bf16.msra.mxu0 %v918
        %924 = vmatprep.subr.bf16.mxu0 0
        %925 = vmatpush1.bf16.msra.mxu0 %v919
        %926 = vmatprep.subr.bf16.mxu0 0
        %927 = vmatpush1.bf16.msra.mxu0 0
        %928 = vmatprep.subr.bf16.mxu0 0
        %929 = vmatpush1.bf16.msra.mxu0 0
        %930 = vmatprep.subr.bf16.mxu0 0
        %931 = vmatpush1.bf16.msra.mxu0 0
        %932 = vmatprep.subr.bf16.mxu0 0
        %933 = vmatpush1.bf16.msra.mxu0 0
        %934 = vmatprep.subr.bf16.mxu0 0
        %935 = vmatpush1.bf16.msra.mxu0 0
        %936 = vmatprep.subr.bf16.mxu0 0
        %937 = vmatpush1.bf16.msra.mxu0 0
        %938 = vmatprep.subr.bf16.mxu0 0
        %939 = vmatpush1.bf16.msra.mxu0 0
        %940 = vmatprep.subr.bf16.mxu0 0
        %941 = vmatpush1.bf16.msra.mxu0 0
        %942 = vmatprep.subr.bf16.mxu0 0
        %943 = vmatpush1.bf16.msra.mxu0 0
        %944 = vmatprep.subr.bf16.mxu0 0
        %945 = vmatpush1.bf16.msra.mxu0 0
        %946 = vmatprep.subr.bf16.mxu0 0
        %947 = vmatpush1.bf16.msra.mxu0 0
        %948 = vmatprep.subr.bf16.mxu0 0
        %949 = vmatpush1.bf16.msra.mxu0 0
        %950 = vmatprep.subr.bf16.mxu0 0
        %951 = vmatpush1.bf16.msra.mxu0 0
        %952 = vmatprep.subr.bf16.mxu0 0
        %953 = vmatpush1.bf16.msra.mxu0 0
        %954 = vmatprep.mubr.bf16.mxu0 0
        %955 = vmatmul.mubr.bf16.gmra.mrb[0].mxu0 %v808
        %v956 = vpop.f32.mrb[0].mxu0
        %v957 = vadd.f32 0.0, %v956
        %v958 = vpop.f32.mrb[0].mxu0
        %v959 = vpop.f32.mrb[0].mxu0
        %v960 = vpop.f32.mrb[0].mxu0
        %961 = vdwg.mxu0
        %v962 = vpack.c.bf16 %v845, %v845
        %v963 = vpack.c.bf16 %v901, %v901
        %v964 = vpack.c.bf16 %v957, %v957
        %vm965 = vcmask 64512
        %v967 = vsel %vm965, %v962, 0
        %v970 = vsel %vm965, %v963, 0
        %972 = vmatprep.subr.bf16.mxu0 0
        %973 = vmatpush1.bf16.xpose.msra.mxu0 %v970
        %974 = vmatprep.subr.bf16.mxu0 0
        %975 = vmatpush1.bf16.xpose.msra.mxu0 0
        %976 = vmatprep.subr.bf16.mxu0 0
        %977 = vmatpush1.bf16.xpose.msra.mxu0 0
        %978 = vmatprep.subr.bf16.mxu0 0
        %979 = vmatpush1.bf16.xpose.msra.mxu0 0
        %980 = vmatprep.subr.bf16.mxu0 0
        %981 = vmatpush1.bf16.xpose.msra.mxu0 0
        %982 = vmatprep.subr.bf16.mxu0 0
        %983 = vmatpush1.bf16.xpose.msra.mxu0 0
        %984 = vmatprep.subr.bf16.mxu0 0
        %985 = vmatpush1.bf16.xpose.msra.mxu0 0
        %986 = vmatprep.subr.bf16.mxu0 0
        %987 = vmatpush1.bf16.xpose.msra.mxu0 0
        %988 = vmatprep.subr.bf16.mxu0 0
        %989 = vmatpush1.bf16.xpose.msra.mxu0 0
        %990 = vmatprep.subr.bf16.mxu0 0
        %991 = vmatpush1.bf16.xpose.msra.mxu0 0
        %992 = vmatprep.subr.bf16.mxu0 0
        %993 = vmatpush1.bf16.xpose.msra.mxu0 0
        %994 = vmatprep.subr.bf16.mxu0 0
        %995 = vmatpush1.bf16.xpose.msra.mxu0 0
        %996 = vmatprep.subr.bf16.mxu0 0
        %997 = vmatpush1.bf16.xpose.msra.mxu0 0
        %998 = vmatprep.subr.bf16.mxu0 0
        %999 = vmatpush1.bf16.xpose.msra.mxu0 0
        %1000 = vmatprep.subr.bf16.mxu0 0
        %1001 = vmatpush1.bf16.xpose.msra.mxu0 0
        %1002 = vmatprep.subr.bf16.mxu0 0
        %1003 = vmatpush1.bf16.xpose.msra.mxu0 0
        %1004 = vmatprep.mubr.bf16.mxu0 0
        %1005 = vmatmul.mubr.bf16.gmra.mrb[0].mxu0 %v967
        %v1006 = vpop.f32.mrb[0].mxu0
        %v1007 = vadd.f32 0.0, %v1006
        %v1008 = vpop.f32.mrb[0].mxu0
        %v1009 = vpop.f32.mrb[0].mxu0
        %v1010 = vpop.f32.mrb[0].mxu0
        %1011 = vdwg.mxu0
        %v1012 = vsel %vm965, %v1007, -inf
        %1013 = vmax.xlane.f32.xlu0 %v1012
        %v1014 = vpop.xlane.xlu0 %1013
        %v1015 = vsub.f32 %v1007, %v1014
        %v1016 = vmul.f32 %v1015, 1.442695
        %v1017 = vpow.pop %v1016
        %v1018 = vsel %vm965, %v1017, 0.0
        %1019 = vadd.xlane.f32.xlu0 %v1018
        %v1020 = vpop.xlane.xlu0 %1019
        %v1021 = vrcp.pop %v1020
        %v1022 = vmul.f32 %v1017, %v1021
        %v1023 = vpack.c.bf16 %v1022, %v1022
        %v1025 = vsel %vm965, %v1023, 0
        %vm1027 = vcmask 1043456
        %v1029 = vsel %vm1027, %v964, 0
        %1031 = vmatprep.subr.bf16.mxu0 0
        %1032 = vmatpush1.bf16.msra.mxu0 %v1029
        %1033 = vmatprep.subr.bf16.mxu0 0
        %1034 = vmatpush1.bf16.msra.mxu0 0
        %1035 = vmatprep.subr.bf16.mxu0 0
        %1036 = vmatpush1.bf16.msra.mxu0 0
        %1037 = vmatprep.subr.bf16.mxu0 0
        %1038 = vmatpush1.bf16.msra.mxu0 0
        %1039 = vmatprep.subr.bf16.mxu0 0
        %1040 = vmatpush1.bf16.msra.mxu0 0
        %1041 = vmatprep.subr.bf16.mxu0 0
        %1042 = vmatpush1.bf16.msra.mxu0 0
        %1043 = vmatprep.subr.bf16.mxu0 0
        %1044 = vmatpush1.bf16.msra.mxu0 0
        %1045 = vmatprep.subr.bf16.mxu0 0
        %1046 = vmatpush1.bf16.msra.mxu0 0
        %1047 = vmatprep.subr.bf16.mxu0 0
        %1048 = vmatpush1.bf16.msra.mxu0 0
        %1049 = vmatprep.subr.bf16.mxu0 0
        %1050 = vmatpush1.bf16.msra.mxu0 0
        %1051 = vmatprep.subr.bf16.mxu0 0
        %1052 = vmatpush1.bf16.msra.mxu0 0
        %1053 = vmatprep.subr.bf16.mxu0 0
        %1054 = vmatpush1.bf16.msra.mxu0 0
        %1055 = vmatprep.subr.bf16.mxu0 0
        %1056 = vmatpush1.bf16.msra.mxu0 0
        %1057 = vmatprep.subr.bf16.mxu0 0
        %1058 = vmatpush1.bf16.msra.mxu0 0
        %1059 = vmatprep.subr.bf16.mxu0 0
        %1060 = vmatpush1.bf16.msra.mxu0 0
        %1061 = vmatprep.subr.bf16.mxu0 0
        %1062 = vmatpush1.bf16.msra.mxu0 0
        %1063 = vmatprep.mubr.bf16.mxu0 0
        %1064 = vmatmul.mubr.bf16.gmra.mrb[0].mxu0 %v1025
        %v1065 = vpop.f32.mrb[0].mxu0
        %v1066 = vadd.f32 0.0, %v1065
        %v1067 = vpop.f32.mrb[0].mxu0
        %v1068 = vpop.f32.mrb[0].mxu0
        %v1069 = vpop.f32.mrb[0].mxu0
        %1070 = vdwg.mxu0
        %v1071 = vpack.c.bf16 %v1066, %v1066
        %v1072 = vld [vmem:[%s703] sm:$0xf]
        %v1074 = vsel %vm965, %v1071, 0
        %v1077 = vsel %vm1027, %v1072, 0
        %1079 = vmatprep.subr.bf16.mxu0 0
        %1080 = vmatpush1.bf16.msra.mxu0 %v1077
        %1081 = vmatprep.subr.bf16.mxu0 0
        %1082 = vmatpush1.bf16.msra.mxu0 0
        %1083 = vmatprep.subr.bf16.mxu0 0
        %1084 = vmatpush1.bf16.msra.mxu0 0
        %1085 = vmatprep.subr.bf16.mxu0 0
        %1086 = vmatpush1.bf16.msra.mxu0 0
        %1087 = vmatprep.subr.bf16.mxu0 0
        %1088 = vmatpush1.bf16.msra.mxu0 0
        %1089 = vmatprep.subr.bf16.mxu0 0
        %1090 = vmatpush1.bf16.msra.mxu0 0
        %1091 = vmatprep.subr.bf16.mxu0 0
        %1092 = vmatpush1.bf16.msra.mxu0 0
        %1093 = vmatprep.subr.bf16.mxu0 0
        %1094 = vmatpush1.bf16.msra.mxu0 0
        %1095 = vmatprep.subr.bf16.mxu0 0
        %1096 = vmatpush1.bf16.msra.mxu0 0
        %1097 = vmatprep.subr.bf16.mxu0 0
        %1098 = vmatpush1.bf16.msra.mxu0 0
        %1099 = vmatprep.subr.bf16.mxu0 0
        %1100 = vmatpush1.bf16.msra.mxu0 0
        %1101 = vmatprep.subr.bf16.mxu0 0
        %1102 = vmatpush1.bf16.msra.mxu0 0
        %1103 = vmatprep.subr.bf16.mxu0 0
        %1104 = vmatpush1.bf16.msra.mxu0 0
        %1105 = vmatprep.subr.bf16.mxu0 0
        %1106 = vmatpush1.bf16.msra.mxu0 0
        %1107 = vmatprep.subr.bf16.mxu0 0
        %1108 = vmatpush1.bf16.msra.mxu0 0
        %1109 = vmatprep.subr.bf16.mxu0 0
        %1110 = vmatpush1.bf16.msra.mxu0 0
        %1111 = vmatprep.mubr.bf16.mxu0 0
        %1112 = vmatmul.mubr.bf16.gmra.mrb[0].mxu0 %v1074
        %v1113 = vpop.f32.mrb[0].mxu0
        %v1114 = vadd.f32 0.0, %v1113
        %v1115 = vpop.f32.mrb[0].mxu0
        %v1116 = vpop.f32.mrb[0].mxu0
        %v1117 = vpop.f32.mrb[0].mxu0
        %1118 = vdwg.mxu0
        %v1119 = vadd.f32 %v756, %v1114
        %s1120 = scalar_lea.vmem %s688, 16
        %v1121 = vld [vmem:[%s1120] sm:$0xf]
        %v1122 = vld [vmem:[%s1120 + $0x4] sm:$0xf]
        %v1123 = vld [vmem:[%s1120 + $0x8] sm:$0xf]
        %v1124 = vld [vmem:[%s1120 + $0xc] sm:$0xf]
        %v1129 = vunpack.c.l.b16 %v1121
        %v1130 = vunpack.c.l.b16 %v1122
        %v1131 = vunpack.c.l.b16 %v1123
        %v1132 = vunpack.c.l.b16 %v1124
        %v1133 = vpack.c.b16 %v1130, %v1129
        %v1134 = vpack.c.b16 %v1132, %v1131
        %1137 = vmatprep.subr.bf16.mxu0 0
        %1138 = vmatpush1.bf16.msra.mxu0 %v1133
        %1139 = vmatprep.subr.bf16.mxu0 0
        %1140 = vmatpush1.bf16.msra.mxu0 %v1134
        %1141 = vmatprep.subr.bf16.mxu0 0
        %1142 = vmatpush1.bf16.msra.mxu0 0
        %1143 = vmatprep.subr.bf16.mxu0 0
        %1144 = vmatpush1.bf16.msra.mxu0 0
        %1145 = vmatprep.subr.bf16.mxu0 0
        %1146 = vmatpush1.bf16.msra.mxu0 0
        %1147 = vmatprep.subr.bf16.mxu0 0
        %1148 = vmatpush1.bf16.msra.mxu0 0
        %1149 = vmatprep.subr.bf16.mxu0 0
        %1150 = vmatpush1.bf16.msra.mxu0 0
        %1151 = vmatprep.subr.bf16.mxu0 0
        %1152 = vmatpush1.bf16.msra.mxu0 0
        %1153 = vmatprep.subr.bf16.mxu0 0
        %1154 = vmatpush1.bf16.msra.mxu0 0
        %1155 = vmatprep.subr.bf16.mxu0 0
        %1156 = vmatpush1.bf16.msra.mxu0 0
        %1157 = vmatprep.subr.bf16.mxu0 0
        %1158 = vmatpush1.bf16.msra.mxu0 0
        %1159 = vmatprep.subr.bf16.mxu0 0
        %1160 = vmatpush1.bf16.msra.mxu0 0
        %1161 = vmatprep.subr.bf16.mxu0 0
        %1162 = vmatpush1.bf16.msra.mxu0 0
        %1163 = vmatprep.subr.bf16.mxu0 0
        %1164 = vmatpush1.bf16.msra.mxu0 0
        %1165 = vmatprep.subr.bf16.mxu0 0
        %1166 = vmatpush1.bf16.msra.mxu0 0
        %1167 = vmatprep.subr.bf16.mxu0 0
        %1168 = vmatpush1.bf16.msra.mxu0 0
        %1169 = vmatprep.mubr.bf16.mxu0 0
        %1170 = vmatmul.mubr.bf16.gmra.mrb[0].mxu0 %v808
        %v1171 = vpop.f32.mrb[0].mxu0
        %v1172 = vadd.f32 0.0, %v1171
        %v1173 = vpop.f32.mrb[0].mxu0
        %v1174 = vpop.f32.mrb[0].mxu0
        %v1175 = vpop.f32.mrb[0].mxu0
        %1176 = vdwg.mxu0
        %s1177 = scalar_lea.vmem %s693, 16
        %v1178 = vld [vmem:[%s1177] sm:$0xf]
        %v1179 = vld [vmem:[%s1177 + $0x4] sm:$0xf]
        %v1180 = vld [vmem:[%s1177 + $0x8] sm:$0xf]
        %v1181 = vld [vmem:[%s1177 + $0xc] sm:$0xf]
        %v1186 = vunpack.c.l.b16 %v1178
        %v1187 = vunpack.c.l.b16 %v1179
        %v1188 = vunpack.c.l.b16 %v1180
        %v1189 = vunpack.c.l.b16 %v1181
        %v1190 = vpack.c.b16 %v1187, %v1186
        %v1191 = vpack.c.b16 %v1189, %v1188
        %1194 = vmatprep.subr.bf16.mxu0 0
        %1195 = vmatpush1.bf16.msra.mxu0 %v1190
        %1196 = vmatprep.subr.bf16.mxu0 0
        %1197 = vmatpush1.bf16.msra.mxu0 %v1191
        %1198 = vmatprep.subr.bf16.mxu0 0
        %1199 = vmatpush1.bf16.msra.mxu0 0
        %1200 = vmatprep.subr.bf16.mxu0 0
        %1201 = vmatpush1.bf16.msra.mxu0 0
        %1202 = vmatprep.subr.bf16.mxu0 0
        %1203 = vmatpush1.bf16.msra.mxu0 0
        %1204 = vmatprep.subr.bf16.mxu0 0
        %1205 = vmatpush1.bf16.msra.mxu0 0
        %1206 = vmatprep.subr.bf16.mxu0 0
        %1207 = vmatpush1.bf16.msra.mxu0 0
        %1208 = vmatprep.subr.bf16.mxu0 0
        %1209 = vmatpush1.bf16.msra.mxu0 0
        %1210 = vmatprep.subr.bf16.mxu0 0
        %1211 = vmatpush1.bf16.msra.mxu0 0
        %1212 = vmatprep.subr.bf16.mxu0 0
        %1213 = vmatpush1.bf16.msra.mxu0 0
        %1214 = vmatprep.subr.bf16.mxu0 0
        %1215 = vmatpush1.bf16.msra.mxu0 0
        %1216 = vmatprep.subr.bf16.mxu0 0
        %1217 = vmatpush1.bf16.msra.mxu0 0
        %1218 = vmatprep.subr.bf16.mxu0 0
        %1219 = vmatpush1.bf16.msra.mxu0 0
        %1220 = vmatprep.subr.bf16.mxu0 0
        %1221 = vmatpush1.bf16.msra.mxu0 0
        %1222 = vmatprep.subr.bf16.mxu0 0
        %1223 = vmatpush1.bf16.msra.mxu0 0
        %1224 = vmatprep.subr.bf16.mxu0 0
        %1225 = vmatpush1.bf16.msra.mxu0 0
        %1226 = vmatprep.mubr.bf16.mxu0 0
        %1227 = vmatmul.mubr.bf16.gmra.mrb[0].mxu0 %v808
        %v1228 = vpop.f32.mrb[0].mxu0
        %v1229 = vadd.f32 0.0, %v1228
        %v1230 = vpop.f32.mrb[0].mxu0
        %v1231 = vpop.f32.mrb[0].mxu0
        %v1232 = vpop.f32.mrb[0].mxu0
        %1233 = vdwg.mxu0
        %s1234 = scalar_lea.vmem %s698, 16
        %v1235 = vld [vmem:[%s1234] sm:$0xf]
        %v1236 = vld [vmem:[%s1234 + $0x4] sm:$0xf]
        %v1237 = vld [vmem:[%s1234 + $0x8] sm:$0xf]
        %v1238 = vld [vmem:[%s1234 + $0xc] sm:$0xf]
        %v1243 = vunpack.c.l.b16 %v1235
        %v1244 = vunpack.c.l.b16 %v1236
        %v1245 = vunpack.c.l.b16 %v1237
        %v1246 = vunpack.c.l.b16 %v1238
        %v1247 = vpack.c.b16 %v1244, %v1243
        %v1248 = vpack.c.b16 %v1246, %v1245
        %1251 = vmatprep.subr.bf16.mxu0 0
        %1252 = vmatpush1.bf16.msra.mxu0 %v1247
        %1253 = vmatprep.subr.bf16.mxu0 0
        %1254 = vmatpush1.bf16.msra.mxu0 %v1248
        %1255 = vmatprep.subr.bf16.mxu0 0
        %1256 = vmatpush1.bf16.msra.mxu0 0
        %1257 = vmatprep.subr.bf16.mxu0 0
        %1258 = vmatpush1.bf16.msra.mxu0 0
        %1259 = vmatprep.subr.bf16.mxu0 0
        %1260 = vmatpush1.bf16.msra.mxu0 0
        %1261 = vmatprep.subr.bf16.mxu0 0
        %1262 = vmatpush1.bf16.msra.mxu0 0
        %1263 = vmatprep.subr.bf16.mxu0 0
        %1264 = vmatpush1.bf16.msra.mxu0 0
        %1265 = vmatprep.subr.bf16.mxu0 0
        %1266 = vmatpush1.bf16.msra.mxu0 0
        %1267 = vmatprep.subr.bf16.mxu0 0
        %1268 = vmatpush1.bf16.msra.mxu0 0
        %1269 = vmatprep.subr.bf16.mxu0 0
        %1270 = vmatpush1.bf16.msra.mxu0 0
        %1271 = vmatprep.subr.bf16.mxu0 0
        %1272 = vmatpush1.bf16.msra.mxu0 0
        %1273 = vmatprep.subr.bf16.mxu0 0
        %1274 = vmatpush1.bf16.msra.mxu0 0
        %1275 = vmatprep.subr.bf16.mxu0 0
        %1276 = vmatpush1.bf16.msra.mxu0 0
        %1277 = vmatprep.subr.bf16.mxu0 0
        %1278 = vmatpush1.bf16.msra.mxu0 0
        %1279 = vmatprep.subr.bf16.mxu0 0
        %1280 = vmatpush1.bf16.msra.mxu0 0
        %1281 = vmatprep.subr.bf16.mxu0 0
        %1282 = vmatpush1.bf16.msra.mxu0 0
        %1283 = vmatprep.mubr.bf16.mxu0 0
        %1284 = vmatmul.mubr.bf16.gmra.mrb[0].mxu0 %v808
        %v1285 = vpop.f32.mrb[0].mxu0
        %v1286 = vadd.f32 0.0, %v1285
        %v1287 = vpop.f32.mrb[0].mxu0
        %v1288 = vpop.f32.mrb[0].mxu0
        %v1289 = vpop.f32.mrb[0].mxu0
        %1290 = vdwg.mxu0
        %v1291 = vpack.c.bf16 %v1172, %v1172
        %v1292 = vpack.c.bf16 %v1229, %v1229
        %v1293 = vpack.c.bf16 %v1286, %v1286
        %v1295 = vsel %vm965, %v1291, 0
        %v1298 = vsel %vm965, %v1292, 0
        %1300 = vmatprep.subr.bf16.mxu0 0
        %1301 = vmatpush1.bf16.xpose.msra.mxu0 %v1298
        %1302 = vmatprep.subr.bf16.mxu0 0
        %1303 = vmatpush1.bf16.xpose.msra.mxu0 0
        %1304 = vmatprep.subr.bf16.mxu0 0
        %1305 = vmatpush1.bf16.xpose.msra.mxu0 0
        %1306 = vmatprep.subr.bf16.mxu0 0
        %1307 = vmatpush1.bf16.xpose.msra.mxu0 0
        %1308 = vmatprep.subr.bf16.mxu0 0
        %1309 = vmatpush1.bf16.xpose.msra.mxu0 0
        %1310 = vmatprep.subr.bf16.mxu0 0
        %1311 = vmatpush1.bf16.xpose.msra.mxu0 0
        %1312 = vmatprep.subr.bf16.mxu0 0
        %1313 = vmatpush1.bf16.xpose.msra.mxu0 0
        %1314 = vmatprep.subr.bf16.mxu0 0
        %1315 = vmatpush1.bf16.xpose.msra.mxu0 0
        %1316 = vmatprep.subr.bf16.mxu0 0
        %1317 = vmatpush1.bf16.xpose.msra.mxu0 0
        %1318 = vmatprep.subr.bf16.mxu0 0
        %1319 = vmatpush1.bf16.xpose.msra.mxu0 0
        %1320 = vmatprep.subr.bf16.mxu0 0
        %1321 = vmatpush1.bf16.xpose.msra.mxu0 0
        %1322 = vmatprep.subr.bf16.mxu0 0
        %1323 = vmatpush1.bf16.xpose.msra.mxu0 0
        %1324 = vmatprep.subr.bf16.mxu0 0
        %1325 = vmatpush1.bf16.xpose.msra.mxu0 0
        %1326 = vmatprep.subr.bf16.mxu0 0
        %1327 = vmatpush1.bf16.xpose.msra.mxu0 0
        %1328 = vmatprep.subr.bf16.mxu0 0
        %1329 = vmatpush1.bf16.xpose.msra.mxu0 0
        %1330 = vmatprep.subr.bf16.mxu0 0
        %1331 = vmatpush1.bf16.xpose.msra.mxu0 0
        %1332 = vmatprep.mubr.bf16.mxu0 0
        %1333 = vmatmul.mubr.bf16.gmra.mrb[0].mxu0 %v1295
        %v1334 = vpop.f32.mrb[0].mxu0
        %v1335 = vadd.f32 0.0, %v1334
        %v1336 = vpop.f32.mrb[0].mxu0
        %v1337 = vpop.f32.mrb[0].mxu0
        %v1338 = vpop.f32.mrb[0].mxu0
        %1339 = vdwg.mxu0
        %v1340 = vsel %vm965, %v1335, -inf
        %1341 = vmax.xlane.f32.xlu0 %v1340
        %v1342 = vpop.xlane.xlu0 %1341
        %v1343 = vsub.f32 %v1335, %v1342
        %v1344 = vmul.f32 %v1343, 1.442695
        %v1345 = vpow.pop %v1344
        %v1346 = vsel %vm965, %v1345, 0.0
        %1347 = vadd.xlane.f32.xlu0 %v1346
        %v1348 = vpop.xlane.xlu0 %1347
        %v1349 = vrcp.pop %v1348
        %v1350 = vmul.f32 %v1345, %v1349
        %v1351 = vpack.c.bf16 %v1350, %v1350
        %v1353 = vsel %vm965, %v1351, 0
        %v1356 = vsel %vm1027, %v1293, 0
        %1358 = vmatprep.subr.bf16.mxu0 0
        %1359 = vmatpush1.bf16.msra.mxu0 %v1356
        %1360 = vmatprep.subr.bf16.mxu0 0
        %1361 = vmatpush1.bf16.msra.mxu0 0
        %1362 = vmatprep.subr.bf16.mxu0 0
        %1363 = vmatpush1.bf16.msra.mxu0 0
        %1364 = vmatprep.subr.bf16.mxu0 0
        %1365 = vmatpush1.bf16.msra.mxu0 0
        %1366 = vmatprep.subr.bf16.mxu0 0
        %1367 = vmatpush1.bf16.msra.mxu0 0
        %1368 = vmatprep.subr.bf16.mxu0 0
        %1369 = vmatpush1.bf16.msra.mxu0 0
        %1370 = vmatprep.subr.bf16.mxu0 0
        %1371 = vmatpush1.bf16.msra.mxu0 0
        %1372 = vmatprep.subr.bf16.mxu0 0
        %1373 = vmatpush1.bf16.msra.mxu0 0
        %1374 = vmatprep.subr.bf16.mxu0 0
        %1375 = vmatpush1.bf16.msra.mxu0 0
        %1376 = vmatprep.subr.bf16.mxu0 0
        %1377 = vmatpush1.bf16.msra.mxu0 0
        %1378 = vmatprep.subr.bf16.mxu0 0
        %1379 = vmatpush1.bf16.msra.mxu0 0
        %1380 = vmatprep.subr.bf16.mxu0 0
        %1381 = vmatpush1.bf16.msra.mxu0 0
        %1382 = vmatprep.subr.bf16.mxu0 0
        %1383 = vmatpush1.bf16.msra.mxu0 0
        %1384 = vmatprep.subr.bf16.mxu0 0
        %1385 = vmatpush1.bf16.msra.mxu0 0
        %1386 = vmatprep.subr.bf16.mxu0 0
        %1387 = vmatpush1.bf16.msra.mxu0 0
        %1388 = vmatprep.subr.bf16.mxu0 0
        %1389 = vmatpush1.bf16.msra.mxu0 0
        %1390 = vmatprep.mubr.bf16.mxu0 0
        %1391 = vmatmul.mubr.bf16.gmra.mrb[0].mxu0 %v1353
        %v1392 = vpop.f32.mrb[0].mxu0
        %v1393 = vadd.f32 0.0, %v1392
        %v1394 = vpop.f32.mrb[0].mxu0
        %v1395 = vpop.f32.mrb[0].mxu0
        %v1396 = vpop.f32.mrb[0].mxu0
        %1397 = vdwg.mxu0
        %v1398 = vpack.c.bf16 %v1393, %v1393
        %s1399 = scalar_lea.vmem %s703, 4
        %v1400 = vld [vmem:[%s1399] sm:$0xf]
        %v1402 = vsel %vm965, %v1398, 0
        %v1405 = vsel %vm1027, %v1400, 0
        %1407 = vmatprep.subr.bf16.mxu0 0
        %1408 = vmatpush1.bf16.msra.mxu0 %v1405
        %1409 = vmatprep.subr.bf16.mxu0 0
        %1410 = vmatpush1.bf16.msra.mxu0 0
        %1411 = vmatprep.subr.bf16.mxu0 0
        %1412 = vmatpush1.bf16.msra.mxu0 0
        %1413 = vmatprep.subr.bf16.mxu0 0
        %1414 = vmatpush1.bf16.msra.mxu0 0
        %1415 = vmatprep.subr.bf16.mxu0 0
        %1416 = vmatpush1.bf16.msra.mxu0 0
        %1417 = vmatprep.subr.bf16.mxu0 0
        %1418 = vmatpush1.bf16.msra.mxu0 0
        %1419 = vmatprep.subr.bf16.mxu0 0
        %1420 = vmatpush1.bf16.msra.mxu0 0
        %1421 = vmatprep.subr.bf16.mxu0 0
        %1422 = vmatpush1.bf16.msra.mxu0 0
        %1423 = vmatprep.subr.bf16.mxu0 0
        %1424 = vmatpush1.bf16.msra.mxu0 0
        %1425 = vmatprep.subr.bf16.mxu0 0
        %1426 = vmatpush1.bf16.msra.mxu0 0
        %1427 = vmatprep.subr.bf16.mxu0 0
        %1428 = vmatpush1.bf16.msra.mxu0 0
        %1429 = vmatprep.subr.bf16.mxu0 0
        %1430 = vmatpush1.bf16.msra.mxu0 0
        %1431 = vmatprep.subr.bf16.mxu0 0
        %1432 = vmatpush1.bf16.msra.mxu0 0
        %1433 = vmatprep.subr.bf16.mxu0 0
        %1434 = vmatpush1.bf16.msra.mxu0 0
        %1435 = vmatprep.subr.bf16.mxu0 0
        %1436 = vmatpush1.bf16.msra.mxu0 0
        %1437 = vmatprep.subr.bf16.mxu0 0
        %1438 = vmatpush1.bf16.msra.mxu0 0
        %1439 = vmatprep.mubr.bf16.mxu0 0
        %1440 = vmatmul.mubr.bf16.gmra.mrb[0].mxu0 %v1402
        %v1441 = vpop.f32.mrb[0].mxu0
        %v1442 = vadd.f32 0.0, %v1441
        %v1443 = vpop.f32.mrb[0].mxu0
        %v1444 = vpop.f32.mrb[0].mxu0
        %v1445 = vpop.f32.mrb[0].mxu0
        %1446 = vdwg.mxu0
        %v1447 = vadd.f32 %v1119, %v1442
        %s1448 = scalar_lea.vmem %s688, 32
        %v1449 = vld [vmem:[%s1448] sm:$0xf]
        %v1450 = vld [vmem:[%s1448 + $0x4] sm:$0xf]
        %v1451 = vld [vmem:[%s1448 + $0x8] sm:$0xf]
        %v1452 = vld [vmem:[%s1448 + $0xc] sm:$0xf]
        %v1457 = vunpack.c.l.b16 %v1449
        %v1458 = vunpack.c.l.b16 %v1450
        %v1459 = vunpack.c.l.b16 %v1451
        %v1460 = vunpack.c.l.b16 %v1452
        %v1461 = vpack.c.b16 %v1458, %v1457
        %v1462 = vpack.c.b16 %v1460, %v1459
        %1465 = vmatprep.subr.bf16.mxu0 0
        %1466 = vmatpush1.bf16.msra.mxu0 %v1461
        %1467 = vmatprep.subr.bf16.mxu0 0
        %1468 = vmatpush1.bf16.msra.mxu0 %v1462
        %1469 = vmatprep.subr.bf16.mxu0 0
        %1470 = vmatpush1.bf16.msra.mxu0 0
        %1471 = vmatprep.subr.bf16.mxu0 0
        %1472 = vmatpush1.bf16.msra.mxu0 0
        %1473 = vmatprep.subr.bf16.mxu0 0
        %1474 = vmatpush1.bf16.msra.mxu0 0
        %1475 = vmatprep.subr.bf16.mxu0 0
        %1476 = vmatpush1.bf16.msra.mxu0 0
        %1477 = vmatprep.subr.bf16.mxu0 0
        %1478 = vmatpush1.bf16.msra.mxu0 0
        %1479 = vmatprep.subr.bf16.mxu0 0
        %1480 = vmatpush1.bf16.msra.mxu0 0
        %1481 = vmatprep.subr.bf16.mxu0 0
        %1482 = vmatpush1.bf16.msra.mxu0 0
        %1483 = vmatprep.subr.bf16.mxu0 0
        %1484 = vmatpush1.bf16.msra.mxu0 0
        %1485 = vmatprep.subr.bf16.mxu0 0
        %1486 = vmatpush1.bf16.msra.mxu0 0
        %1487 = vmatprep.subr.bf16.mxu0 0
        %1488 = vmatpush1.bf16.msra.mxu0 0
        %1489 = vmatprep.subr.bf16.mxu0 0
        %1490 = vmatpush1.bf16.msra.mxu0 0
        %1491 = vmatprep.subr.bf16.mxu0 0
        %1492 = vmatpush1.bf16.msra.mxu0 0
        %1493 = vmatprep.subr.bf16.mxu0 0
        %1494 = vmatpush1.bf16.msra.mxu0 0
        %1495 = vmatprep.subr.bf16.mxu0 0
        %1496 = vmatpush1.bf16.msra.mxu0 0
        %1497 = vmatprep.mubr.bf16.mxu0 0
        %1498 = vmatmul.mubr.bf16.gmra.mrb[0].mxu0 %v808
        %v1499 = vpop.f32.mrb[0].mxu0
        %v1500 = vadd.f32 0.0, %v1499
        %v1501 = vpop.f32.mrb[0].mxu0
        %v1502 = vpop.f32.mrb[0].mxu0
        %v1503 = vpop.f32.mrb[0].mxu0
        %1504 = vdwg.mxu0
        %s1505 = scalar_lea.vmem %s693, 32
        %v1506 = vld [vmem:[%s1505] sm:$0xf]
        %v1507 = vld [vmem:[%s1505 + $0x4] sm:$0xf]
        %v1508 = vld [vmem:[%s1505 + $0x8] sm:$0xf]
        %v1509 = vld [vmem:[%s1505 + $0xc] sm:$0xf]
        %v1514 = vunpack.c.l.b16 %v1506
        %v1515 = vunpack.c.l.b16 %v1507
        %v1516 = vunpack.c.l.b16 %v1508
        %v1517 = vunpack.c.l.b16 %v1509
        %v1518 = vpack.c.b16 %v1515, %v1514
        %v1519 = vpack.c.b16 %v1517, %v1516
        %1522 = vmatprep.subr.bf16.mxu0 0
        %1523 = vmatpush1.bf16.msra.mxu0 %v1518
        %1524 = vmatprep.subr.bf16.mxu0 0
        %1525 = vmatpush1.bf16.msra.mxu0 %v1519
        %1526 = vmatprep.subr.bf16.mxu0 0
        %1527 = vmatpush1.bf16.msra.mxu0 0
        %1528 = vmatprep.subr.bf16.mxu0 0
        %1529 = vmatpush1.bf16.msra.mxu0 0
        %1530 = vmatprep.subr.bf16.mxu0 0
        %1531 = vmatpush1.bf16.msra.mxu0 0
        %1532 = vmatprep.subr.bf16.mxu0 0
        %1533 = vmatpush1.bf16.msra.mxu0 0
        %1534 = vmatprep.subr.bf16.mxu0 0
        %1535 = vmatpush1.bf16.msra.mxu0 0
        %1536 = vmatprep.subr.bf16.mxu0 0
        %1537 = vmatpush1.bf16.msra.mxu0 0
        %1538 = vmatprep.subr.bf16.mxu0 0
        %1539 = vmatpush1.bf16.msra.mxu0 0
        %1540 = vmatprep.subr.bf16.mxu0 0
        %1541 = vmatpush1.bf16.msra.mxu0 0
        %1542 = vmatprep.subr.bf16.mxu0 0
        %1543 = vmatpush1.bf16.msra.mxu0 0
        %1544 = vmatprep.subr.bf16.mxu0 0
        %1545 = vmatpush1.bf16.msra.mxu0 0
        %1546 = vmatprep.subr.bf16.mxu0 0
        %1547 = vmatpush1.bf16.msra.mxu0 0
        %1548 = vmatprep.subr.bf16.mxu0 0
        %1549 = vmatpush1.bf16.msra.mxu0 0
        %1550 = vmatprep.subr.bf16.mxu0 0
        %1551 = vmatpush1.bf16.msra.mxu0 0
        %1552 = vmatprep.subr.bf16.mxu0 0
        %1553 = vmatpush1.bf16.msra.mxu0 0
        %1554 = vmatprep.mubr.bf16.mxu0 0
        %1555 = vmatmul.mubr.bf16.gmra.mrb[0].mxu0 %v808
        %v1556 = vpop.f32.mrb[0].mxu0
        %v1557 = vadd.f32 0.0, %v1556
        %v1558 = vpop.f32.mrb[0].mxu0
        %v1559 = vpop.f32.mrb[0].mxu0
        %v1560 = vpop.f32.mrb[0].mxu0
        %1561 = vdwg.mxu0
        %s1562 = scalar_lea.vmem %s698, 32
        %v1563 = vld [vmem:[%s1562] sm:$0xf]
        %v1564 = vld [vmem:[%s1562 + $0x4] sm:$0xf]
        %v1565 = vld [vmem:[%s1562 + $0x8] sm:$0xf]
        %v1566 = vld [vmem:[%s1562 + $0xc] sm:$0xf]
        %v1571 = vunpack.c.l.b16 %v1563
        %v1572 = vunpack.c.l.b16 %v1564
        %v1573 = vunpack.c.l.b16 %v1565
        %v1574 = vunpack.c.l.b16 %v1566
        %v1575 = vpack.c.b16 %v1572, %v1571
        %v1576 = vpack.c.b16 %v1574, %v1573
        %1579 = vmatprep.subr.bf16.mxu0 0
        %1580 = vmatpush1.bf16.msra.mxu0 %v1575
        %1581 = vmatprep.subr.bf16.mxu0 0
        %1582 = vmatpush1.bf16.msra.mxu0 %v1576
        %1583 = vmatprep.subr.bf16.mxu0 0
        %1584 = vmatpush1.bf16.msra.mxu0 0
        %1585 = vmatprep.subr.bf16.mxu0 0
        %1586 = vmatpush1.bf16.msra.mxu0 0
        %1587 = vmatprep.subr.bf16.mxu0 0
        %1588 = vmatpush1.bf16.msra.mxu0 0
        %1589 = vmatprep.subr.bf16.mxu0 0
        %1590 = vmatpush1.bf16.msra.mxu0 0
        %1591 = vmatprep.subr.bf16.mxu0 0
        %1592 = vmatpush1.bf16.msra.mxu0 0
        %1593 = vmatprep.subr.bf16.mxu0 0
        %1594 = vmatpush1.bf16.msra.mxu0 0
        %1595 = vmatprep.subr.bf16.mxu0 0
        %1596 = vmatpush1.bf16.msra.mxu0 0
        %1597 = vmatprep.subr.bf16.mxu0 0
        %1598 = vmatpush1.bf16.msra.mxu0 0
        %1599 = vmatprep.subr.bf16.mxu0 0
        %1600 = vmatpush1.bf16.msra.mxu0 0
        %1601 = vmatprep.subr.bf16.mxu0 0
        %1602 = vmatpush1.bf16.msra.mxu0 0
        %1603 = vmatprep.subr.bf16.mxu0 0
        %1604 = vmatpush1.bf16.msra.mxu0 0
        %1605 = vmatprep.subr.bf16.mxu0 0
        %1606 = vmatpush1.bf16.msra.mxu0 0
        %1607 = vmatprep.subr.bf16.mxu0 0
        %1608 = vmatpush1.bf16.msra.mxu0 0
        %1609 = vmatprep.subr.bf16.mxu0 0
        %1610 = vmatpush1.bf16.msra.mxu0 0
        %1611 = vmatprep.mubr.bf16.mxu0 0
        %1612 = vmatmul.mubr.bf16.gmra.mrb[0].mxu0 %v808
        %v1613 = vpop.f32.mrb[0].mxu0
        %v1614 = vadd.f32 0.0, %v1613
        %v1615 = vpop.f32.mrb[0].mxu0
        %v1616 = vpop.f32.mrb[0].mxu0
        %v1617 = vpop.f32.mrb[0].mxu0
        %1618 = vdwg.mxu0
        %v1619 = vpack.c.bf16 %v1500, %v1500
        %v1620 = vpack.c.bf16 %v1557, %v1557
        %v1621 = vpack.c.bf16 %v1614, %v1614
        %v1623 = vsel %vm965, %v1619, 0
        %v1626 = vsel %vm965, %v1620, 0
        %1628 = vmatprep.subr.bf16.mxu0 0
        %1629 = vmatpush1.bf16.xpose.msra.mxu0 %v1626
        %1630 = vmatprep.subr.bf16.mxu0 0
        %1631 = vmatpush1.bf16.xpose.msra.mxu0 0
        %1632 = vmatprep.subr.bf16.mxu0 0
        %1633 = vmatpush1.bf16.xpose.msra.mxu0 0
        %1634 = vmatprep.subr.bf16.mxu0 0
        %1635 = vmatpush1.bf16.xpose.msra.mxu0 0
        %1636 = vmatprep.subr.bf16.mxu0 0
        %1637 = vmatpush1.bf16.xpose.msra.mxu0 0
        %1638 = vmatprep.subr.bf16.mxu0 0
        %1639 = vmatpush1.bf16.xpose.msra.mxu0 0
        %1640 = vmatprep.subr.bf16.mxu0 0
        %1641 = vmatpush1.bf16.xpose.msra.mxu0 0
        %1642 = vmatprep.subr.bf16.mxu0 0
        %1643 = vmatpush1.bf16.xpose.msra.mxu0 0
        %1644 = vmatprep.subr.bf16.mxu0 0
        %1645 = vmatpush1.bf16.xpose.msra.mxu0 0
        %1646 = vmatprep.subr.bf16.mxu0 0
        %1647 = vmatpush1.bf16.xpose.msra.mxu0 0
        %1648 = vmatprep.subr.bf16.mxu0 0
        %1649 = vmatpush1.bf16.xpose.msra.mxu0 0
        %1650 = vmatprep.subr.bf16.mxu0 0
        %1651 = vmatpush1.bf16.xpose.msra.mxu0 0
        %1652 = vmatprep.subr.bf16.mxu0 0
        %1653 = vmatpush1.bf16.xpose.msra.mxu0 0
        %1654 = vmatprep.subr.bf16.mxu0 0
        %1655 = vmatpush1.bf16.xpose.msra.mxu0 0
        %1656 = vmatprep.subr.bf16.mxu0 0
        %1657 = vmatpush1.bf16.xpose.msra.mxu0 0
        %1658 = vmatprep.subr.bf16.mxu0 0
        %1659 = vmatpush1.bf16.xpose.msra.mxu0 0
        %1660 = vmatprep.mubr.bf16.mxu0 0
        %1661 = vmatmul.mubr.bf16.gmra.mrb[0].mxu0 %v1623
        %v1662 = vpop.f32.mrb[0].mxu0
        %v1663 = vadd.f32 0.0, %v1662
        %v1664 = vpop.f32.mrb[0].mxu0
        %v1665 = vpop.f32.mrb[0].mxu0
        %v1666 = vpop.f32.mrb[0].mxu0
        %1667 = vdwg.mxu0
        %v1668 = vsel %vm965, %v1663, -inf
        %1669 = vmax.xlane.f32.xlu0 %v1668
        %v1670 = vpop.xlane.xlu0 %1669
        %v1671 = vsub.f32 %v1663, %v1670
        %v1672 = vmul.f32 %v1671, 1.442695
        %v1673 = vpow.pop %v1672
        %v1674 = vsel %vm965, %v1673, 0.0
        %1675 = vadd.xlane.f32.xlu0 %v1674
        %v1676 = vpop.xlane.xlu0 %1675
        %v1677 = vrcp.pop %v1676
        %v1678 = vmul.f32 %v1673, %v1677
        %v1679 = vpack.c.bf16 %v1678, %v1678
        %v1681 = vsel %vm965, %v1679, 0
        %v1684 = vsel %vm1027, %v1621, 0
        %1686 = vmatprep.subr.bf16.mxu0 0
        %1687 = vmatpush1.bf16.msra.mxu0 %v1684
        %1688 = vmatprep.subr.bf16.mxu0 0
        %1689 = vmatpush1.bf16.msra.mxu0 0
        %1690 = vmatprep.subr.bf16.mxu0 0
        %1691 = vmatpush1.bf16.msra.mxu0 0
        %1692 = vmatprep.subr.bf16.mxu0 0
        %1693 = vmatpush1.bf16.msra.mxu0 0
        %1694 = vmatprep.subr.bf16.mxu0 0
        %1695 = vmatpush1.bf16.msra.mxu0 0
        %1696 = vmatprep.subr.bf16.mxu0 0
        %1697 = vmatpush1.bf16.msra.mxu0 0
        %1698 = vmatprep.subr.bf16.mxu0 0
        %1699 = vmatpush1.bf16.msra.mxu0 0
        %1700 = vmatprep.subr.bf16.mxu0 0
        %1701 = vmatpush1.bf16.msra.mxu0 0
        %1702 = vmatprep.subr.bf16.mxu0 0
        %1703 = vmatpush1.bf16.msra.mxu0 0
        %1704 = vmatprep.subr.bf16.mxu0 0
        %1705 = vmatpush1.bf16.msra.mxu0 0
        %1706 = vmatprep.subr.bf16.mxu0 0
        %1707 = vmatpush1.bf16.msra.mxu0 0
        %1708 = vmatprep.subr.bf16.mxu0 0
        %1709 = vmatpush1.bf16.msra.mxu0 0
        %1710 = vmatprep.subr.bf16.mxu0 0
        %1711 = vmatpush1.bf16.msra.mxu0 0
        %1712 = vmatprep.subr.bf16.mxu0 0
        %1713 = vmatpush1.bf16.msra.mxu0 0
        %1714 = vmatprep.subr.bf16.mxu0 0
        %1715 = vmatpush1.bf16.msra.mxu0 0
        %1716 = vmatprep.subr.bf16.mxu0 0
        %1717 = vmatpush1.bf16.msra.mxu0 0
        %1718 = vmatprep.mubr.bf16.mxu0 0
        %1719 = vmatmul.mubr.bf16.gmra.mrb[0].mxu0 %v1681
        %v1720 = vpop.f32.mrb[0].mxu0
        %v1721 = vadd.f32 0.0, %v1720
        %v1722 = vpop.f32.mrb[0].mxu0
        %v1723 = vpop.f32.mrb[0].mxu0
        %v1724 = vpop.f32.mrb[0].mxu0
        %1725 = vdwg.mxu0
        %v1726 = vpack.c.bf16 %v1721, %v1721
        %s1727 = scalar_lea.vmem %s703, 8
        %v1728 = vld [vmem:[%s1727] sm:$0xf]
        %v1730 = vsel %vm965, %v1726, 0
        %v1733 = vsel %vm1027, %v1728, 0
        %1735 = vmatprep.subr.bf16.mxu0 0
        %1736 = vmatpush1.bf16.msra.mxu0 %v1733
        %1737 = vmatprep.subr.bf16.mxu0 0
        %1738 = vmatpush1.bf16.msra.mxu0 0
        %1739 = vmatprep.subr.bf16.mxu0 0
        %1740 = vmatpush1.bf16.msra.mxu0 0
        %1741 = vmatprep.subr.bf16.mxu0 0
        %1742 = vmatpush1.bf16.msra.mxu0 0
        %1743 = vmatprep.subr.bf16.mxu0 0
        %1744 = vmatpush1.bf16.msra.mxu0 0
        %1745 = vmatprep.subr.bf16.mxu0 0
        %1746 = vmatpush1.bf16.msra.mxu0 0
        %1747 = vmatprep.subr.bf16.mxu0 0
        %1748 = vmatpush1.bf16.msra.mxu0 0
        %1749 = vmatprep.subr.bf16.mxu0 0
        %1750 = vmatpush1.bf16.msra.mxu0 0
        %1751 = vmatprep.subr.bf16.mxu0 0
        %1752 = vmatpush1.bf16.msra.mxu0 0
        %1753 = vmatprep.subr.bf16.mxu0 0
        %1754 = vmatpush1.bf16.msra.mxu0 0
        %1755 = vmatprep.subr.bf16.mxu0 0
        %1756 = vmatpush1.bf16.msra.mxu0 0
        %1757 = vmatprep.subr.bf16.mxu0 0
        %1758 = vmatpush1.bf16.msra.mxu0 0
        %1759 = vmatprep.subr.bf16.mxu0 0
        %1760 = vmatpush1.bf16.msra.mxu0 0
        %1761 = vmatprep.subr.bf16.mxu0 0
        %1762 = vmatpush1.bf16.msra.mxu0 0
        %1763 = vmatprep.subr.bf16.mxu0 0
        %1764 = vmatpush1.bf16.msra.mxu0 0
        %1765 = vmatprep.subr.bf16.mxu0 0
        %1766 = vmatpush1.bf16.msra.mxu0 0
        %1767 = vmatprep.mubr.bf16.mxu0 0
        %1768 = vmatmul.mubr.bf16.gmra.mrb[0].mxu0 %v1730
        %v1769 = vpop.f32.mrb[0].mxu0
        %v1770 = vadd.f32 0.0, %v1769
        %v1771 = vpop.f32.mrb[0].mxu0
        %v1772 = vpop.f32.mrb[0].mxu0
        %v1773 = vpop.f32.mrb[0].mxu0
        %1774 = vdwg.mxu0
        %v1775 = vadd.f32 %v1447, %v1770
        %s1776 = scalar_lea.vmem %s688, 48
        %v1777 = vld [vmem:[%s1776] sm:$0xf]
        %v1778 = vld [vmem:[%s1776 + $0x4] sm:$0xf]
        %v1779 = vld [vmem:[%s1776 + $0x8] sm:$0xf]
        %v1780 = vld [vmem:[%s1776 + $0xc] sm:$0xf]
        %v1785 = vunpack.c.l.b16 %v1777
        %v1786 = vunpack.c.l.b16 %v1778
        %v1787 = vunpack.c.l.b16 %v1779
        %v1788 = vunpack.c.l.b16 %v1780
        %v1789 = vpack.c.b16 %v1786, %v1785
        %v1790 = vpack.c.b16 %v1788, %v1787
        %1793 = vmatprep.subr.bf16.mxu0 0
        %1794 = vmatpush1.bf16.msra.mxu0 %v1789
        %1795 = vmatprep.subr.bf16.mxu0 0
        %1796 = vmatpush1.bf16.msra.mxu0 %v1790
        %1797 = vmatprep.subr.bf16.mxu0 0
        %1798 = vmatpush1.bf16.msra.mxu0 0
        %1799 = vmatprep.subr.bf16.mxu0 0
        %1800 = vmatpush1.bf16.msra.mxu0 0
        %1801 = vmatprep.subr.bf16.mxu0 0
        %1802 = vmatpush1.bf16.msra.mxu0 0
        %1803 = vmatprep.subr.bf16.mxu0 0
        %1804 = vmatpush1.bf16.msra.mxu0 0
        %1805 = vmatprep.subr.bf16.mxu0 0
        %1806 = vmatpush1.bf16.msra.mxu0 0
        %1807 = vmatprep.subr.bf16.mxu0 0
        %1808 = vmatpush1.bf16.msra.mxu0 0
        %1809 = vmatprep.subr.bf16.mxu0 0
        %1810 = vmatpush1.bf16.msra.mxu0 0
        %1811 = vmatprep.subr.bf16.mxu0 0
        %1812 = vmatpush1.bf16.msra.mxu0 0
        %1813 = vmatprep.subr.bf16.mxu0 0
        %1814 = vmatpush1.bf16.msra.mxu0 0
        %1815 = vmatprep.subr.bf16.mxu0 0
        %1816 = vmatpush1.bf16.msra.mxu0 0
        %1817 = vmatprep.subr.bf16.mxu0 0
        %1818 = vmatpush1.bf16.msra.mxu0 0
        %1819 = vmatprep.subr.bf16.mxu0 0
        %1820 = vmatpush1.bf16.msra.mxu0 0
        %1821 = vmatprep.subr.bf16.mxu0 0
        %1822 = vmatpush1.bf16.msra.mxu0 0
        %1823 = vmatprep.subr.bf16.mxu0 0
        %1824 = vmatpush1.bf16.msra.mxu0 0
        %1825 = vmatprep.mubr.bf16.mxu0 0
        %1826 = vmatmul.mubr.bf16.gmra.mrb[0].mxu0 %v808
        %v1827 = vpop.f32.mrb[0].mxu0
        %v1828 = vadd.f32 0.0, %v1827
        %v1829 = vpop.f32.mrb[0].mxu0
        %v1830 = vpop.f32.mrb[0].mxu0
        %v1831 = vpop.f32.mrb[0].mxu0
        %1832 = vdwg.mxu0
        %s1833 = scalar_lea.vmem %s693, 48
        %v1834 = vld [vmem:[%s1833] sm:$0xf]
        %v1835 = vld [vmem:[%s1833 + $0x4] sm:$0xf]
        %v1836 = vld [vmem:[%s1833 + $0x8] sm:$0xf]
        %v1837 = vld [vmem:[%s1833 + $0xc] sm:$0xf]
        %v1842 = vunpack.c.l.b16 %v1834
        %v1843 = vunpack.c.l.b16 %v1835
        %v1844 = vunpack.c.l.b16 %v1836
        %v1845 = vunpack.c.l.b16 %v1837
        %v1846 = vpack.c.b16 %v1843, %v1842
        %v1847 = vpack.c.b16 %v1845, %v1844
        %1850 = vmatprep.subr.bf16.mxu0 0
        %1851 = vmatpush1.bf16.msra.mxu0 %v1846
        %1852 = vmatprep.subr.bf16.mxu0 0
        %1853 = vmatpush1.bf16.msra.mxu0 %v1847
        %1854 = vmatprep.subr.bf16.mxu0 0
        %1855 = vmatpush1.bf16.msra.mxu0 0
        %1856 = vmatprep.subr.bf16.mxu0 0
        %1857 = vmatpush1.bf16.msra.mxu0 0
        %1858 = vmatprep.subr.bf16.mxu0 0
        %1859 = vmatpush1.bf16.msra.mxu0 0
        %1860 = vmatprep.subr.bf16.mxu0 0
        %1861 = vmatpush1.bf16.msra.mxu0 0
        %1862 = vmatprep.subr.bf16.mxu0 0
        %1863 = vmatpush1.bf16.msra.mxu0 0
        %1864 = vmatprep.subr.bf16.mxu0 0
        %1865 = vmatpush1.bf16.msra.mxu0 0
        %1866 = vmatprep.subr.bf16.mxu0 0
        %1867 = vmatpush1.bf16.msra.mxu0 0
        %1868 = vmatprep.subr.bf16.mxu0 0
        %1869 = vmatpush1.bf16.msra.mxu0 0
        %1870 = vmatprep.subr.bf16.mxu0 0
        %1871 = vmatpush1.bf16.msra.mxu0 0
        %1872 = vmatprep.subr.bf16.mxu0 0
        %1873 = vmatpush1.bf16.msra.mxu0 0
        %1874 = vmatprep.subr.bf16.mxu0 0
        %1875 = vmatpush1.bf16.msra.mxu0 0
        %1876 = vmatprep.subr.bf16.mxu0 0
        %1877 = vmatpush1.bf16.msra.mxu0 0
        %1878 = vmatprep.subr.bf16.mxu0 0
        %1879 = vmatpush1.bf16.msra.mxu0 0
        %1880 = vmatprep.subr.bf16.mxu0 0
        %1881 = vmatpush1.bf16.msra.mxu0 0
        %1882 = vmatprep.mubr.bf16.mxu0 0
        %1883 = vmatmul.mubr.bf16.gmra.mrb[0].mxu0 %v808
        %v1884 = vpop.f32.mrb[0].mxu0
        %v1885 = vadd.f32 0.0, %v1884
        %v1886 = vpop.f32.mrb[0].mxu0
        %v1887 = vpop.f32.mrb[0].mxu0
        %v1888 = vpop.f32.mrb[0].mxu0
        %1889 = vdwg.mxu0
        %s1890 = scalar_lea.vmem %s698, 48
        %v1891 = vld [vmem:[%s1890] sm:$0xf]
        %v1892 = vld [vmem:[%s1890 + $0x4] sm:$0xf]
        %v1893 = vld [vmem:[%s1890 + $0x8] sm:$0xf]
        %v1894 = vld [vmem:[%s1890 + $0xc] sm:$0xf]
        %v1899 = vunpack.c.l.b16 %v1891
        %v1900 = vunpack.c.l.b16 %v1892
        %v1901 = vunpack.c.l.b16 %v1893
        %v1902 = vunpack.c.l.b16 %v1894
        %v1903 = vpack.c.b16 %v1900, %v1899
        %v1904 = vpack.c.b16 %v1902, %v1901
        %1907 = vmatprep.subr.bf16.mxu0 0
        %1908 = vmatpush1.bf16.msra.mxu0 %v1903
        %1909 = vmatprep.subr.bf16.mxu0 0
        %1910 = vmatpush1.bf16.msra.mxu0 %v1904
        %1911 = vmatprep.subr.bf16.mxu0 0
        %1912 = vmatpush1.bf16.msra.mxu0 0
        %1913 = vmatprep.subr.bf16.mxu0 0
        %1914 = vmatpush1.bf16.msra.mxu0 0
        %1915 = vmatprep.subr.bf16.mxu0 0
        %1916 = vmatpush1.bf16.msra.mxu0 0
        %1917 = vmatprep.subr.bf16.mxu0 0
        %1918 = vmatpush1.bf16.msra.mxu0 0
        %1919 = vmatprep.subr.bf16.mxu0 0
        %1920 = vmatpush1.bf16.msra.mxu0 0
        %1921 = vmatprep.subr.bf16.mxu0 0
        %1922 = vmatpush1.bf16.msra.mxu0 0
        %1923 = vmatprep.subr.bf16.mxu0 0
        %1924 = vmatpush1.bf16.msra.mxu0 0
        %1925 = vmatprep.subr.bf16.mxu0 0
        %1926 = vmatpush1.bf16.msra.mxu0 0
        %1927 = vmatprep.subr.bf16.mxu0 0
        %1928 = vmatpush1.bf16.msra.mxu0 0
        %1929 = vmatprep.subr.bf16.mxu0 0
        %1930 = vmatpush1.bf16.msra.mxu0 0
        %1931 = vmatprep.subr.bf16.mxu0 0
        %1932 = vmatpush1.bf16.msra.mxu0 0
        %1933 = vmatprep.subr.bf16.mxu0 0
        %1934 = vmatpush1.bf16.msra.mxu0 0
        %1935 = vmatprep.subr.bf16.mxu0 0
        %1936 = vmatpush1.bf16.msra.mxu0 0
        %1937 = vmatprep.subr.bf16.mxu0 0
        %1938 = vmatpush1.bf16.msra.mxu0 0
        %1939 = vmatprep.mubr.bf16.mxu0 0
        %1940 = vmatmul.mubr.bf16.gmra.mrb[0].mxu0 %v808
        %v1941 = vpop.f32.mrb[0].mxu0
        %v1942 = vadd.f32 0.0, %v1941
        %v1943 = vpop.f32.mrb[0].mxu0
        %v1944 = vpop.f32.mrb[0].mxu0
        %v1945 = vpop.f32.mrb[0].mxu0
        %1946 = vdwg.mxu0
        %v1947 = vpack.c.bf16 %v1828, %v1828
        %v1948 = vpack.c.bf16 %v1885, %v1885
        %v1949 = vpack.c.bf16 %v1942, %v1942
        %v1951 = vsel %vm965, %v1947, 0
        %v1954 = vsel %vm965, %v1948, 0
        %1956 = vmatprep.subr.bf16.mxu0 0
        %1957 = vmatpush1.bf16.xpose.msra.mxu0 %v1954
        %1958 = vmatprep.subr.bf16.mxu0 0
        %1959 = vmatpush1.bf16.xpose.msra.mxu0 0
        %1960 = vmatprep.subr.bf16.mxu0 0
        %1961 = vmatpush1.bf16.xpose.msra.mxu0 0
        %1962 = vmatprep.subr.bf16.mxu0 0
        %1963 = vmatpush1.bf16.xpose.msra.mxu0 0
        %1964 = vmatprep.subr.bf16.mxu0 0
        %1965 = vmatpush1.bf16.xpose.msra.mxu0 0
        %1966 = vmatprep.subr.bf16.mxu0 0
        %1967 = vmatpush1.bf16.xpose.msra.mxu0 0
        %1968 = vmatprep.subr.bf16.mxu0 0
        %1969 = vmatpush1.bf16.xpose.msra.mxu0 0
        %1970 = vmatprep.subr.bf16.mxu0 0
        %1971 = vmatpush1.bf16.xpose.msra.mxu0 0
        %1972 = vmatprep.subr.bf16.mxu0 0
        %1973 = vmatpush1.bf16.xpose.msra.mxu0 0
        %1974 = vmatprep.subr.bf16.mxu0 0
        %1975 = vmatpush1.bf16.xpose.msra.mxu0 0
        %1976 = vmatprep.subr.bf16.mxu0 0
        %1977 = vmatpush1.bf16.xpose.msra.mxu0 0
        %1978 = vmatprep.subr.bf16.mxu0 0
        %1979 = vmatpush1.bf16.xpose.msra.mxu0 0
        %1980 = vmatprep.subr.bf16.mxu0 0
        %1981 = vmatpush1.bf16.xpose.msra.mxu0 0
        %1982 = vmatprep.subr.bf16.mxu0 0
        %1983 = vmatpush1.bf16.xpose.msra.mxu0 0
        %1984 = vmatprep.subr.bf16.mxu0 0
        %1985 = vmatpush1.bf16.xpose.msra.mxu0 0
        %1986 = vmatprep.subr.bf16.mxu0 0
        %1987 = vmatpush1.bf16.xpose.msra.mxu0 0
        %1988 = vmatprep.mubr.bf16.mxu0 0
        %1989 = vmatmul.mubr.bf16.gmra.mrb[0].mxu0 %v1951
        %v1990 = vpop.f32.mrb[0].mxu0
        %v1991 = vadd.f32 0.0, %v1990
        %v1992 = vpop.f32.mrb[0].mxu0
        %v1993 = vpop.f32.mrb[0].mxu0
        %v1994 = vpop.f32.mrb[0].mxu0
        %1995 = vdwg.mxu0
        %v1996 = vsel %vm965, %v1991, -inf
        %1997 = vmax.xlane.f32.xlu0 %v1996
        %v1998 = vpop.xlane.xlu0 %1997
        %v1999 = vsub.f32 %v1991, %v1998
        %v2000 = vmul.f32 %v1999, 1.442695
        %v2001 = vpow.pop %v2000
        %v2002 = vsel %vm965, %v2001, 0.0
        %2003 = vadd.xlane.f32.xlu0 %v2002
        %v2004 = vpop.xlane.xlu0 %2003
        %v2005 = vrcp.pop %v2004
        %v2006 = vmul.f32 %v2001, %v2005
        %v2007 = vpack.c.bf16 %v2006, %v2006
        %v2009 = vsel %vm965, %v2007, 0
        %v2012 = vsel %vm1027, %v1949, 0
        %2014 = vmatprep.subr.bf16.mxu0 0
        %2015 = vmatpush1.bf16.msra.mxu0 %v2012
        %2016 = vmatprep.subr.bf16.mxu0 0
        %2017 = vmatpush1.bf16.msra.mxu0 0
        %2018 = vmatprep.subr.bf16.mxu0 0
        %2019 = vmatpush1.bf16.msra.mxu0 0
        %2020 = vmatprep.subr.bf16.mxu0 0
        %2021 = vmatpush1.bf16.msra.mxu0 0
        %2022 = vmatprep.subr.bf16.mxu0 0
        %2023 = vmatpush1.bf16.msra.mxu0 0
        %2024 = vmatprep.subr.bf16.mxu0 0
        %2025 = vmatpush1.bf16.msra.mxu0 0
        %2026 = vmatprep.subr.bf16.mxu0 0
        %2027 = vmatpush1.bf16.msra.mxu0 0
        %2028 = vmatprep.subr.bf16.mxu0 0
        %2029 = vmatpush1.bf16.msra.mxu0 0
        %2030 = vmatprep.subr.bf16.mxu0 0
        %2031 = vmatpush1.bf16.msra.mxu0 0
        %2032 = vmatprep.subr.bf16.mxu0 0
        %2033 = vmatpush1.bf16.msra.mxu0 0
        %2034 = vmatprep.subr.bf16.mxu0 0
        %2035 = vmatpush1.bf16.msra.mxu0 0
        %2036 = vmatprep.subr.bf16.mxu0 0
        %2037 = vmatpush1.bf16.msra.mxu0 0
        %2038 = vmatprep.subr.bf16.mxu0 0
        %2039 = vmatpush1.bf16.msra.mxu0 0
        %2040 = vmatprep.subr.bf16.mxu0 0
        %2041 = vmatpush1.bf16.msra.mxu0 0
        %2042 = vmatprep.subr.bf16.mxu0 0
        %2043 = vmatpush1.bf16.msra.mxu0 0
        %2044 = vmatprep.subr.bf16.mxu0 0
        %2045 = vmatpush1.bf16.msra.mxu0 0
        %2046 = vmatprep.mubr.bf16.mxu0 0
        %2047 = vmatmul.mubr.bf16.gmra.mrb[0].mxu0 %v2009
        %v2048 = vpop.f32.mrb[0].mxu0
        %v2049 = vadd.f32 0.0, %v2048
        %v2050 = vpop.f32.mrb[0].mxu0
        %v2051 = vpop.f32.mrb[0].mxu0
        %v2052 = vpop.f32.mrb[0].mxu0
        %2053 = vdwg.mxu0
        %v2054 = vpack.c.bf16 %v2049, %v2049
        %s2055 = scalar_lea.vmem %s703, 12
        %v2056 = vld [vmem:[%s2055] sm:$0xf]
        %v2058 = vsel %vm965, %v2054, 0
        %v2061 = vsel %vm1027, %v2056, 0
        %2063 = vmatprep.subr.bf16.mxu0 0
        %2064 = vmatpush1.bf16.msra.mxu0 %v2061
        %2065 = vmatprep.subr.bf16.mxu0 0
        %2066 = vmatpush1.bf16.msra.mxu0 0
        %2067 = vmatprep.subr.bf16.mxu0 0
        %2068 = vmatpush1.bf16.msra.mxu0 0
        %2069 = vmatprep.subr.bf16.mxu0 0
        %2070 = vmatpush1.bf16.msra.mxu0 0
        %2071 = vmatprep.subr.bf16.mxu0 0
        %2072 = vmatpush1.bf16.msra.mxu0 0
        %2073 = vmatprep.subr.bf16.mxu0 0
        %2074 = vmatpush1.bf16.msra.mxu0 0
        %2075 = vmatprep.subr.bf16.mxu0 0
        %2076 = vmatpush1.bf16.msra.mxu0 0
        %2077 = vmatprep.subr.bf16.mxu0 0
        %2078 = vmatpush1.bf16.msra.mxu0 0
        %2079 = vmatprep.subr.bf16.mxu0 0
        %2080 = vmatpush1.bf16.msra.mxu0 0
        %2081 = vmatprep.subr.bf16.mxu0 0
        %2082 = vmatpush1.bf16.msra.mxu0 0
        %2083 = vmatprep.subr.bf16.mxu0 0
        %2084 = vmatpush1.bf16.msra.mxu0 0
        %2085 = vmatprep.subr.bf16.mxu0 0
        %2086 = vmatpush1.bf16.msra.mxu0 0
        %2087 = vmatprep.subr.bf16.mxu0 0
        %2088 = vmatpush1.bf16.msra.mxu0 0
        %2089 = vmatprep.subr.bf16.mxu0 0
        %2090 = vmatpush1.bf16.msra.mxu0 0
        %2091 = vmatprep.subr.bf16.mxu0 0
        %2092 = vmatpush1.bf16.msra.mxu0 0
        %2093 = vmatprep.subr.bf16.mxu0 0
        %2094 = vmatpush1.bf16.msra.mxu0 0
        %2095 = vmatprep.mubr.bf16.mxu0 0
        %2096 = vmatmul.mubr.bf16.gmra.mrb[0].mxu0 %v2058
        %v2097 = vpop.f32.mrb[0].mxu0
        %v2098 = vadd.f32 0.0, %v2097
        %v2099 = vpop.f32.mrb[0].mxu0
        %v2100 = vpop.f32.mrb[0].mxu0
        %v2101 = vpop.f32.mrb[0].mxu0
        %2102 = vdwg.mxu0
        %v2103 = vadd.f32 %v1775, %v2098
        %2104 = vst.msk [vmem:[#allocation3] sm:$0xff] %vm757, %v2103
        %v2105 = vld [vmem:[%s730] sm:$0x1]
        %v2107 = vlaneseq
        %v2108 = vshrl.u32 %v2107, 7
        %v2109 = vsub.s32 0, %v2108
        %v2110 = vrot.slane %v2105, %v2109
        %2112 = vst.msk [vmem:[#allocation4] sm:$0xff] %vm757, %v2110
      $region84: #{encoder_forward.1} parent=75 // pred_fallthru
        _
      %v2113 = vld [vmem:[#allocation2] sm:$0xf]
      %v2114 = vld [vmem:[%s711] sm:$0xf]
      %v2115 = vld [vmem:[%s711 + $0x4] sm:$0xf]
      %v2116 = vld [vmem:[%s711 + $0x8] sm:$0xf]
      %v2117 = vld [vmem:[%s711 + $0xc] sm:$0xf]
      %v2118 = vld [vmem:[%s717] sm:$0x1]
      %v2120 = vlaneseq
      %v2121 = vshrl.u32 %v2120, 7
      %v2122 = vsub.s32 0, %v2121
      %v2123 = vrot.slane %v2118, %v2122
      %v2129 = vunpack.c.l.b16 %v2114
      %v2130 = vunpack.c.l.b16 %v2115
      %v2131 = vunpack.c.l.b16 %v2116
      %v2132 = vunpack.c.l.b16 %v2117
      %v2133 = vpack.c.b16 %v2130, %v2129
      %v2134 = vpack.c.b16 %v2132, %v2131
      %vm2137 = vcmask 261120
      %v2139 = vsel %vm2137, %v2113, 0
      %2141 = vmatprep.subr.bf16.mxu0 0
      %2142 = vmatpush1.bf16.msra.mxu0 %v2133
      %2143 = vmatprep.subr.bf16.mxu0 0
      %2144 = vmatpush1.bf16.msra.mxu0 %v2134
      %2145 = vmatprep.subr.bf16.mxu0 0
      %2146 = vmatpush1.bf16.msra.mxu0 0
      %2147 = vmatprep.subr.bf16.mxu0 0
      %2148 = vmatpush1.bf16.msra.mxu0 0
      %2149 = vmatprep.subr.bf16.mxu0 0
      %2150 = vmatpush1.bf16.msra.mxu0 0
      %2151 = vmatprep.subr.bf16.mxu0 0
      %2152 = vmatpush1.bf16.msra.mxu0 0
      %2153 = vmatprep.subr.bf16.mxu0 0
      %2154 = vmatpush1.bf16.msra.mxu0 0
      %2155 = vmatprep.subr.bf16.mxu0 0
      %2156 = vmatpush1.bf16.msra.mxu0 0
      %2157 = vmatprep.subr.bf16.mxu0 0
      %2158 = vmatpush1.bf16.msra.mxu0 0
      %2159 = vmatprep.subr.bf16.mxu0 0
      %2160 = vmatpush1.bf16.msra.mxu0 0
      %2161 = vmatprep.subr.bf16.mxu0 0
      %2162 = vmatpush1.bf16.msra.mxu0 0
      %2163 = vmatprep.subr.bf16.mxu0 0
      %2164 = vmatpush1.bf16.msra.mxu0 0
      %2165 = vmatprep.subr.bf16.mxu0 0
      %2166 = vmatpush1.bf16.msra.mxu0 0
      %2167 = vmatprep.subr.bf16.mxu0 0
      %2168 = vmatpush1.bf16.msra.mxu0 0
      %2169 = vmatprep.subr.bf16.mxu0 0
      %2170 = vmatpush1.bf16.msra.mxu0 0
      %2171 = vmatprep.subr.bf16.mxu0 0
      %2172 = vmatpush1.bf16.msra.mxu0 0
      %2173 = vmatprep.mubr.bf16.mxu0 0
      %2174 = vmatmul.mubr.bf16.gmra.mrb[0].mxu0 %v2139
      %v2175 = vpop.f32.mrb[0].mxu0
      %v2176 = vadd.f32 %v2123, %v2175
      %v2177 = vpop.f32.mrb[0].mxu0
      %v2178 = vpop.f32.mrb[0].mxu0
      %v2179 = vpop.f32.mrb[0].mxu0
      %2180 = vdwg.mxu0
      %v2181 = vmax.f32 %v2176, 0.0
      %v2182 = vpack.c.bf16 %v2181, %v2181
      %v2183 = vld [vmem:[#allocation4] sm:$0xff]
      %v2184 = vld [vmem:[%s726] sm:$0xf]
      %v2185 = vld [vmem:[%s726 + $0x4] sm:$0xf]
      %v2186 = vld [vmem:[%s726 + $0x8] sm:$0xf]
      %v2187 = vld [vmem:[%s726 + $0xc] sm:$0xf]
      %v2188 = vld [vmem:[%s726 + $0x10] sm:$0xf]
      %v2189 = vld [vmem:[%s726 + $0x14] sm:$0xf]
      %v2190 = vld [vmem:[%s726 + $0x18] sm:$0xf]
      %v2191 = vld [vmem:[%s726 + $0x1c] sm:$0xf]
      %v2200 = vunpack.c.l.b16 %v2184
      %v2201 = vunpack.c.l.b16 %v2185
      %v2202 = vunpack.c.l.b16 %v2186
      %v2203 = vunpack.c.l.b16 %v2187
      %v2204 = vunpack.c.l.b16 %v2188
      %v2205 = vunpack.c.l.b16 %v2189
      %v2206 = vunpack.c.l.b16 %v2190
      %v2207 = vunpack.c.l.b16 %v2191
      %v2208 = vpack.c.b16 %v2201, %v2200
      %v2209 = vpack.c.b16 %v2203, %v2202
      %v2210 = vpack.c.b16 %v2205, %v2204
      %v2211 = vpack.c.b16 %v2207, %v2206
      %vm2216 = vcmask 523264
      %v2218 = vsel %vm2216, %v2182, 0
      %2220 = vmatprep.subr.bf16.mxu0 0
      %2221 = vmatpush1.bf16.msra.mxu0 %v2208
      %2222 = vmatprep.subr.bf16.mxu0 0
      %2223 = vmatpush1.bf16.msra.mxu0 %v2209
      %2224 = vmatprep.subr.bf16.mxu0 0
      %2225 = vmatpush1.bf16.msra.mxu0 %v2210
      %2226 = vmatprep.subr.bf16.mxu0 0
      %2227 = vmatpush1.bf16.msra.mxu0 %v2211
      %2228 = vmatprep.subr.bf16.mxu0 0
      %2229 = vmatpush1.bf16.msra.mxu0 0
      %2230 = vmatprep.subr.bf16.mxu0 0
      %2231 = vmatpush1.bf16.msra.mxu0 0
      %2232 = vmatprep.subr.bf16.mxu0 0
      %2233 = vmatpush1.bf16.msra.mxu0 0
      %2234 = vmatprep.subr.bf16.mxu0 0
      %2235 = vmatpush1.bf16.msra.mxu0 0
      %2236 = vmatprep.subr.bf16.mxu0 0
      %2237 = vmatpush1.bf16.msra.mxu0 0
      %2238 = vmatprep.subr.bf16.mxu0 0
      %2239 = vmatpush1.bf16.msra.mxu0 0
      %2240 = vmatprep.subr.bf16.mxu0 0
      %2241 = vmatpush1.bf16.msra.mxu0 0
      %2242 = vmatprep.subr.bf16.mxu0 0
      %2243 = vmatpush1.bf16.msra.mxu0 0
      %2244 = vmatprep.subr.bf16.mxu0 0
      %2245 = vmatpush1.bf16.msra.mxu0 0
      %2246 = vmatprep.subr.bf16.mxu0 0
      %2247 = vmatpush1.bf16.msra.mxu0 0
      %2248 = vmatprep.subr.bf16.mxu0 0
      %2249 = vmatpush1.bf16.msra.mxu0 0
      %2250 = vmatprep.subr.bf16.mxu0 0
      %2251 = vmatpush1.bf16.msra.mxu0 0
      %2252 = vmatprep.mubr.bf16.mxu0 0
      %2253 = vmatmul.mubr.bf16.gmra.mrb[0].mxu0 %v2218
      %v2254 = vpop.f32.mrb[0].mxu0
      %v2255 = vadd.f32 0.0, %v2254
      %v2256 = vpop.f32.mrb[0].mxu0
      %v2257 = vpop.f32.mrb[0].mxu0
      %v2258 = vpop.f32.mrb[0].mxu0
      %2259 = vdwg.mxu0
      %v2260 = vadd.f32 %v2183, %v2255
      %2261 = vst.msk [vmem:[#allocation4] sm:$0xff] %vm2137, %v2260
      // Predicated region
      $region85: #{encoder_forward.1} parent=75 // pred_check
        %p2262 = pneg %p743
      $region86: #{encoder_forward.1} parent=75 // pred_check_branch
        %2264 = sbr.rel (%p2262) target = $region88
      $region87: #{encoder_forward.1} parent=75 // pred_region
        %v2265 = vld [vmem:[#allocation4] sm:$0xff]
        %v2266 = vsel %vm2137, %v2265, 0.0
        %2267 = vadd.xlane.f32.xlu0 %v2266
        %v2268 = vpop.xlane.xlu0 %2267
        %v2269 = vrcp.pop 32.0
        %v2270 = vmul.f32 %v2268, %v2269
        %v2271 = vsub.f32 %v2265, %v2270
        %v2272 = vmul.f32 %v2271, %v2271
        %v2273 = vsel %vm2137, %v2272, 0.0
        %2274 = vadd.xlane.f32.xlu0 %v2273
        %v2275 = vpop.xlane.xlu0 %2274
        %v2276 = vmul.f32 %v2275, %v2269
        %v2277 = vadd.f32 %v2276, 1e-06
        %v2278 = vrsqrt.pop %v2277
        %v2279 = vmul.f32 %v2271, %v2278
        %v2280 = vld [vmem:[%s733] sm:$0x1]
        %v2282 = vlaneseq
        %v2283 = vshrl.u32 %v2282, 7
        %v2284 = vsub.s32 0, %v2283
        %v2285 = vrot.slane %v2280, %v2284
        %v2287 = vmul.f32 %v2279, %v2285
        %v2288 = vld [vmem:[%s736] sm:$0x1]
        %v2290 = vlaneseq
        %v2291 = vshrl.u32 %v2290, 7
        %v2292 = vsub.s32 0, %v2291
        %v2293 = vrot.slane %v2288, %v2292
        %v2295 = vadd.f32 %v2287, %v2293
        %v2296 = vld [vmem:[#allocation3] sm:$0xff]
        %v2297 = vadd.f32 %v2296, %v2295
        %2298 = vst.msk [vmem:[%s740] sm:$0xff] %vm2137, %v2297
      $region88: #{encoder_forward.1} parent=75 // pred_fallthru
        _
      %p2299 = scmp.lt.s32.totalorder %s30, 1
      %s2300 = scalar_select %p2299, %s30, 1
      %s2301 = smul.addr %s2300, 8
      %s2302 = scalar_lea.vmem %s14, %s2301
      // Predicated region
      $region89: #{encoder_forward.1} parent=75 // pred_check
        %p2303 = pneg %p432
      $region90: #{encoder_forward.1} parent=75 // pred_check_branch
        %2305 = sbr.rel (%p2303) target = $region92
      $region91: #{encoder_forward.1} parent=75 // pred_region
        _
      $region92: #{encoder_forward.1} parent=75 // pred_fallthru
        _
    $region76: #{encoder_forward.1} parent=5 // pred_fallthru
      _
    %p2306 = scmp.le.s32.totalorder 2, %s20
    // Predicated region
    $region93: #{encoder_forward.1} parent=5 // pred_check
      %p2307 = pneg %p2306
    $region94: #{encoder_forward.1} parent=5 // pred_check_branch
      %2309 = sbr.rel (%p2307) target = $region96
    $region95: #{encoder_forward.1} parent=5 // pred_region
      %s2310 = ssub.s32 %s20, 2
      // Predicated region
      $region97: #{encoder_forward.1} parent=95 // pred_check
        %p2311 = pneg %p438
      $region98: #{encoder_forward.1} parent=95 // pred_check_branch
        %2313 = sbr.rel (%p2311) target = $region100
      $region99: #{encoder_forward.1} parent=95 // pred_region
        %p2314 = scmp.lt.s32.totalorder %s33, 1
        %s2315 = scalar_select %p2314, %s33, 1
        %s2316 = smul.addr %s2315, 8
        %s2317 = scalar_lea.vmem %s14, %s2316
      $region100: #{encoder_forward.1} parent=95 // pred_fallthru
        _
    $region96: #{encoder_forward.1} parent=5 // pred_fallthru
      _
  $region6: #{encoder_forward.1} parent=0 // loop_footer
    %s24 = sadd.s32 1, %s20
  $region7: #{encoder_forward.1} parent=0 // loop_footer_branch
    %19 = sbr.rel target = $region3
  $region8: #{encoder_forward.1} parent=0 // loop_exit
    _

</llo_original>
